<compile_context>
chip_gen: v7x
topology: tpu7x:2x2x1
jax: 0.10.0
libtpu: 0.0.40
codegen_flags: <defaults>
</compile_context>

<pallas_src>
import functools

import jax
import jax.numpy as jnp
from jax import lax
from jax.experimental import pallas as pl
from jax.experimental.pallas import tpu as pltpu


# ----------------------------- Pallas kernel -------------------------------

def _onehot_lstm_kernel(x_ids_ref, h0_ref, c0_ref, embed_ref,
                        wih1_ref, whh1_ref, b1_ref,
                        w2_ref, b2_ref,
                        wlin_ref, blin_ref,
                        logits_ref, hn_ref, cn_ref,
                        xw1_ref, act_ref, *, T, B, H):
    """Whole forward pass in one invocation; recurrence fully unrolled."""
    Cp1 = embed_ref.shape[0]

    # ---------------- hoisted work (off the serial recurrence) ----------------
    # In-kernel embedding gather as a one-hot matmul, fused with the layer-1
    # input projection for ALL timesteps: (T*B,Cp1)@(Cp1,E)@(E,4H) + b1.
    ids = x_ids_ref[...]                                             # (T*B, 1) int32, t-major
    cols = lax.broadcasted_iota(jnp.int32, (T * B, Cp1), 1)
    onehot = (cols == ids).astype(jnp.float32)                       # (T*B, Cp1)
    emb = jnp.dot(onehot, embed_ref[...],
                  preferred_element_type=jnp.float32)                # (T*B, E)
    xw1_ref[...] = (jnp.dot(emb, wih1_ref[...],
                            preferred_element_type=jnp.float32)
                    + b1_ref[...])                                   # (T*B, 4H)

    # Loop-invariant weights / hoisted bias broadcast (JAX does not CSE these).
    whh1 = whh1_ref[...]                                             # (H, 4H)
    w2 = w2_ref[...]                                                 # (2H, 4H) = [W_ih2; W_hh2]
    b2b = jnp.broadcast_to(b2_ref[...], (B, 4 * H))

    def gate_act(gates):
        # One full-width sigmoid + one tanh (EUP), then static lane slices.
        sg = jax.nn.sigmoid(gates)
        tg = jnp.tanh(gates)
        return sg[:, 0:H], sg[:, H:2 * H], tg[:, 2 * H:3 * H], sg[:, 3 * H:4 * H]

    # ------------------------------ recurrence --------------------------------
    h1 = h0_ref[0]
    c1 = c0_ref[0]
    h2 = h0_ref[1]
    c2 = c0_ref[1]

    for t in range(T):                       # fully unrolled; all slices static
        row = t * B
        xw1_t = xw1_ref[pl.ds(row, B), :]                            # (B, 4H) precomputed

        # Layer 1 (PyTorch gate order i, f, g, o; b_ih + b_hh folded into b1).
        g1 = xw1_t + jnp.dot(h1, whh1, preferred_element_type=jnp.float32)
        i1, f1, gg1, o1 = gate_act(g1)
        c1 = f1 * c1 + i1 * gg1
        h1 = o1 * jnp.tanh(c1)

        # Layer 2: single fused matmul over the concatenated hidden state.
        h12 = jnp.concatenate([h1, h2], axis=-1)                     # (B, 2H), 64-lane splice
        g2 = jnp.dot(h12, w2, preferred_element_type=jnp.float32) + b2b
        i2, f2, gg2, o2 = gate_act(g2)
        c2 = f2 * c2 + i2 * gg2
        h2 = o2 * jnp.tanh(c2)

        # Only the ReLU'd activation is kept; projection happens after the loop.
        act_ref[pl.ds(row, B), :] = jnp.maximum(h2, 0.0)

    # ------------------------------ finalize -----------------------------------
    hn_ref[0] = h1
    hn_ref[1] = h2
    cn_ref[0] = c1
    cn_ref[1] = c2

    # One batched output projection + one unmasked full-width store (16x128).
    logits_ref[...] = (jnp.dot(act_ref[...], wlin_ref[...],
                               preferred_element_type=jnp.float32)
                       + blin_ref[...])


def _run_lstm_pallas(x_ids, h0, c0, embed, wih1, whh1, b1, w2, b2, wlin, blin, T, B):
    """x_ids: (T*B, 1) int32, t-major.  Returns logits (T*B,Cp1), h_n, c_n (2,B,H)."""
    H = h0.shape[-1]
    Cp1 = embed.shape[0]

    kernel = functools.partial(_onehot_lstm_kernel, T=T, B=B, H=H)

    out_shapes = (
        jax.ShapeDtypeStruct((T * B, Cp1), jnp.float32),  # logits, flat & lane-dense
        jax.ShapeDtypeStruct((2, B, H), jnp.float32),     # h_n
        jax.ShapeDtypeStruct((2, B, H), jnp.float32),     # c_n
    )

    vmem = lambda: pl.BlockSpec(memory_space=pltpu.MemorySpace.VMEM)

    return pl.pallas_call(
        kernel,
        out_shape=out_shapes,
        in_specs=[vmem() for _ in range(11)],             # everything VMEM-resident
        out_specs=(vmem(), vmem(), vmem()),
        scratch_shapes=[pltpu.VMEM((T * B, 4 * H), jnp.float32),  # hoisted x@W_ih1 + b1
                        pltpu.VMEM((T * B, H), jnp.float32)],     # relu(h2) per step
    )(x_ids, h0, c0, embed, wih1, whh1, b1, w2, b2, wlin, blin)


# ------------------------------ model wrapper -------------------------------

def init_params(key, num_classes, embed_dim, hidden_dim):
    """Deterministic synthetic parameters (shapes match OneHotNet_eCPU.__init__)."""
    Cp1 = num_classes + 1
    ks = jax.random.split(key, 8)
    s = 0.1
    p = {}
    p["embed"] = s * jax.random.normal(ks[0], (Cp1, embed_dim), jnp.float32)
    # LSTM layer 1: torch W_ih (4H, E), W_hh (4H, H); stored transposed here.
    p["wih1"] = s * jax.random.normal(ks[1], (embed_dim, 4 * hidden_dim), jnp.float32)
    p["whh1"] = s * jax.random.normal(ks[2], (hidden_dim, 4 * hidden_dim), jnp.float32)
    p["b1"] = s * jax.random.normal(ks[3], (1, 4 * hidden_dim), jnp.float32)  # b_ih + b_hh folded
    # LSTM layer 2: input dim = hidden_dim.
    p["wih2"] = s * jax.random.normal(ks[4], (hidden_dim, 4 * hidden_dim), jnp.float32)
    p["whh2"] = s * jax.random.normal(ks[5], (hidden_dim, 4 * hidden_dim), jnp.float32)
    p["b2"] = s * jax.random.normal(ks[6], (1, 4 * hidden_dim), jnp.float32)
    # Output linear: torch (Cp1, H); stored transposed + bias.
    kw, kb = jax.random.split(ks[7])
    p["wlin"] = s * jax.random.normal(kw, (hidden_dim, Cp1), jnp.float32)
    p["blin"] = s * jax.random.normal(kb, (1, Cp1), jnp.float32)
    return p


@jax.jit
def onehotnet_forward(X, params, h0, c0):
    """X: (B, T) int32 indices.  Returns (logits (B,T,Cp1), (h_n, c_n))."""
    B, T = X.shape
    Cp1 = params["embed"].shape[0]
    if T == 0:  # static shape guard: never build a zero-row kernel
        return jnp.zeros((B, 0, Cp1), jnp.float32), (h0, c0)

    # Only the 64-byte index vector is rearranged outside the kernel (t-major);
    # the embedding gather itself happens inside the kernel as a one-hot matmul.
    x_ids = jnp.transpose(X).reshape(T * B, 1).astype(jnp.int32)
    # Stack layer-2 weights ONCE so the kernel does a single (B,2H)@(2H,4H) per step.
    w2 = jnp.concatenate([params["wih2"], params["whh2"]], axis=0)   # (2H, 4H)

    logits_flat, h_n, c_n = _run_lstm_pallas(
        x_ids, h0, c0, params["embed"],
        params["wih1"], params["whh1"], params["b1"],
        w2, params["b2"], params["wlin"], params["blin"], T, B)

    # Tiny (T*B*128) slab: reshape + batch_first transpose stays in the wrapper.
    logits = jnp.transpose(logits_flat.reshape(T, B, Cp1), (1, 0, 2))
    return logits, (h_n, c_n)


# ------------------------------ pure-JAX reference ---------------------------

def _ref_forward(X, params, h0, c0):
    emb = jnp.take(params["embed"], X, axis=0)           # (B, T, E)
    x_tbe = jnp.transpose(emb, (1, 0, 2))
    H = h0.shape[-1]

    def cell(x_in, h, c, wih, whh, b):
        gates = x_in @ wih + h @ whh + b
        i = jax.nn.sigmoid(gates[:, 0:H])
        f = jax.nn.sigmoid(gates[:, H:2 * H])
        g = jnp.tanh(gates[:, 2 * H:3 * H])
        o = jax.nn.sigmoid(gates[:, 3 * H:4 * H])
        c_new = f * c + i * g
        return o * jnp.tanh(c_new), c_new

    def step(carry, x_t):
        h1, c1, h2, c2 = carry
        h1, c1 = cell(x_t, h1, c1, params["wih1"], params["whh1"], params["b1"])
        h2, c2 = cell(h1, h2, c2, params["wih2"], params["whh2"], params["b2"])
        out_t = jnp.maximum(h2, 0.0) @ params["wlin"] + params["blin"]
        return (h1, c1, h2, c2), out_t

    (h1, c1, h2, c2), outs = lax.scan(step, (h0[0], c0[0], h0[1], c0[1]), x_tbe)
    logits = jnp.transpose(outs, (1, 0, 2))
    return logits, (jnp.stack([h1, h2]), jnp.stack([c1, c2]))


# ----------------------------------- main -----------------------------------

if __name__ == "__main__":
    num_classes = 127        # -> Cp1 = 128 (lane-dense logits)
    embed_dim = 16
    hidden_dim = 32
    num_layers = 2
    batch, seq = 2, 8

    key = jax.random.PRNGKey(0)
    k_x, k_p = jax.random.split(key)

    params = init_params(k_p, num_classes, embed_dim, hidden_dim)
    X = jax.random.randint(k_x, (batch, seq), 0, num_classes + 1, dtype=jnp.int32)

    # lstm_state = None in the PyTorch module -> zeros.
    h0 = jnp.zeros((num_layers, batch, hidden_dim), jnp.float32)
    c0 = jnp.zeros((num_layers, batch, hidden_dim), jnp.float32)

    logits, (h_n, c_n) = onehotnet_forward(X, params, h0, c0)
    jax.block_until_ready((logits, h_n, c_n))

    ref_logits, (ref_h, ref_c) = _ref_forward(X, params, h0, c0)
    assert logits.shape == (batch, seq, num_classes + 1)
    assert h_n.shape == (num_layers, batch, hidden_dim)
    assert jnp.allclose(logits, ref_logits, rtol=3e-3, atol=3e-3)
    assert jnp.allclose(h_n, ref_h, rtol=3e-3, atol=3e-3)
    assert jnp.allclose(c_n, ref_c, rtol=3e-3, atol=3e-3)

    print("KERNEL_OK")
</pallas_src>

<mosaic_0001>
module attributes {stable_mosaic.version = 11 : i64} {
  func.func @_onehot_lstm_kernel(%arg0: memref<16x1xi32, #tpu.memory_space<vmem>>, %arg1: memref<2x2x32xf32, #tpu.memory_space<vmem>>, %arg2: memref<2x2x32xf32, #tpu.memory_space<vmem>>, %arg3: memref<128x16xf32, #tpu.memory_space<vmem>>, %arg4: memref<16x128xf32, #tpu.memory_space<vmem>>, %arg5: memref<32x128xf32, #tpu.memory_space<vmem>>, %arg6: memref<1x128xf32, #tpu.memory_space<vmem>>, %arg7: memref<64x128xf32, #tpu.memory_space<vmem>>, %arg8: memref<1x128xf32, #tpu.memory_space<vmem>>, %arg9: memref<32x128xf32, #tpu.memory_space<vmem>>, %arg10: memref<1x128xf32, #tpu.memory_space<vmem>>, %arg11: memref<16x128xf32, #tpu.memory_space<vmem>>, %arg12: memref<2x2x32xf32, #tpu.memory_space<vmem>>, %arg13: memref<2x2x32xf32, #tpu.memory_space<vmem>>, %arg14: memref<16x128xf32, #tpu.memory_space<vmem>>, %arg15: memref<16x32xf32, #tpu.memory_space<vmem>>) attributes {dimension_semantics = [], scalar_prefetch = 0 : i64, scratch_operands = 2 : i64, tpu.core_type = #tpu.core_type<tc>} {
    %c0 = arith.constant 0 : index
    %c0_0 = arith.constant 0 : index
    %0 = vector.load %arg0[%c0, %c0_0] : memref<16x1xi32, #tpu.memory_space<vmem>>, vector<16x1xi32>
    %1 = tpu.iota {dimensions = array<i32: 1>} : vector<16x128xi32>
    %2 = vector.broadcast %0 : vector<16x1xi32> to vector<16x128xi32>
    %3 = arith.cmpi eq, %1, %2 : vector<16x128xi32>
    %4 = arith.extui %3 : vector<16x128xi1> to vector<16x128xi32>
    %5 = arith.sitofp %4 : vector<16x128xi32> to vector<16x128xf32>
    %c0_1 = arith.constant 0 : index
    %c0_2 = arith.constant 0 : index
    %6 = vector.load %arg3[%c0_1, %c0_2] : memref<128x16xf32, #tpu.memory_space<vmem>>, vector<128x16xf32>
    %cst = arith.constant dense<0.000000e+00> : vector<16x16xf32>
    %7 = tpu.matmul %5, %6, %cst {dimension_numbers = #tpu.dot_dimension_numbers<[1], [0], [0], [1], [0, 0, 1, 1], [], []>} : vector<16x128xf32>, vector<128x16xf32>, vector<16x16xf32> -> vector<16x16xf32>
    %c0_3 = arith.constant 0 : index
    %c0_4 = arith.constant 0 : index
    %8 = vector.load %arg4[%c0_3, %c0_4] : memref<16x128xf32, #tpu.memory_space<vmem>>, vector<16x128xf32>
    %cst_5 = arith.constant dense<0.000000e+00> : vector<16x128xf32>
    %9 = tpu.matmul %7, %8, %cst_5 {dimension_numbers = #tpu.dot_dimension_numbers<[1], [0], [0], [1], [0, 0, 1, 1], [], []>} : vector<16x16xf32>, vector<16x128xf32>, vector<16x128xf32> -> vector<16x128xf32>
    %c0_6 = arith.constant 0 : index
    %c0_7 = arith.constant 0 : index
    %10 = vector.load %arg6[%c0_6, %c0_7] : memref<1x128xf32, #tpu.memory_space<vmem>>, vector<1x128xf32>
    %11 = vector.broadcast %10 : vector<1x128xf32> to vector<16x128xf32>
    %12 = arith.addf %9, %11 : vector<16x128xf32>
    %c0_8 = arith.constant 0 : index
    %c0_9 = arith.constant 0 : index
    %13 = vector.load %arg14[%c0_8, %c0_9] : memref<16x128xf32, #tpu.memory_space<vmem>>, vector<16x128xf32>
    tpu.vector_store %arg14[%c0_8, %c0_9], %12 {strides = array<i32>} : memref<16x128xf32, #tpu.memory_space<vmem>>, vector<16x128xf32>,
    %c0_10 = arith.constant 0 : index
    %c0_11 = arith.constant 0 : index
    %14 = vector.load %arg5[%c0_10, %c0_11] : memref<32x128xf32, #tpu.memory_space<vmem>>, vector<32x128xf32>
    %c0_12 = arith.constant 0 : index
    %c0_13 = arith.constant 0 : index
    %15 = vector.load %arg7[%c0_12, %c0_13] : memref<64x128xf32, #tpu.memory_space<vmem>>, vector<64x128xf32>
    %c0_14 = arith.constant 0 : index
    %c0_15 = arith.constant 0 : index
    %16 = vector.load %arg8[%c0_14, %c0_15] : memref<1x128xf32, #tpu.memory_space<vmem>>, vector<1x128xf32>
    %17 = vector.shape_cast %16 : vector<1x128xf32> to vector<1x128xf32>
    %18 = vector.broadcast %17 : vector<1x128xf32> to vector<2x128xf32>
    %c0_16 = arith.constant 0 : index
    %c0_17 = arith.constant 0 : index
    %c0_18 = arith.constant 0 : index
    %19 = vector.load %arg1[%c0_16, %c0_17, %c0_18] : memref<2x2x32xf32, #tpu.memory_space<vmem>>, vector<1x2x32xf32>
    %20 = vector.shape_cast %19 : vector<1x2x32xf32> to vector<2x32xf32>
    %c0_19 = arith.constant 0 : index
    %c0_20 = arith.constant 0 : index
    %c0_21 = arith.constant 0 : index
    %21 = vector.load %arg2[%c0_19, %c0_20, %c0_21] : memref<2x2x32xf32, #tpu.memory_space<vmem>>, vector<1x2x32xf32>
    %22 = vector.shape_cast %21 : vector<1x2x32xf32> to vector<2x32xf32>
    %c1 = arith.constant 1 : index
    %c0_22 = arith.constant 0 : index
    %c0_23 = arith.constant 0 : index
    %23 = vector.load %arg1[%c1, %c0_22, %c0_23] : memref<2x2x32xf32, #tpu.memory_space<vmem>>, vector<1x2x32xf32>
    %24 = vector.shape_cast %23 : vector<1x2x32xf32> to vector<2x32xf32>
    %c1_24 = arith.constant 1 : index
    %c0_25 = arith.constant 0 : index
    %c0_26 = arith.constant 0 : index
    %25 = vector.load %arg2[%c1_24, %c0_25, %c0_26] : memref<2x2x32xf32, #tpu.memory_space<vmem>>, vector<1x2x32xf32>
    %26 = vector.shape_cast %25 : vector<1x2x32xf32> to vector<2x32xf32>
    %c0_27 = arith.constant 0 : index
    %c0_28 = arith.constant 0 : index
    %27 = vector.load %arg14[%c0_27, %c0_28] : memref<16x128xf32, #tpu.memory_space<vmem>>, vector<2x128xf32>
    %cst_29 = arith.constant dense<0.000000e+00> : vector<2x128xf32>
    %28 = tpu.matmul %20, %14, %cst_29 {dimension_numbers = #tpu.dot_dimension_numbers<[1], [0], [0], [1], [0, 0, 1, 1], [], []>} : vector<2x32xf32>, vector<32x128xf32>, vector<2x128xf32> -> vector<2x128xf32>
    %29 = arith.addf %27, %28 : vector<2x128xf32>
    %30 = arith.negf %29 : vector<2x128xf32>
    %31 = math.exp %30 : vector<2x128xf32>
    %cst_30 = arith.constant 1.000000e+00 : f32
    %32 = vector.broadcast %cst_30 : f32 to vector<2x128xf32>
    %33 = arith.addf %32, %31 : vector<2x128xf32>
    %34 = arith.divf %32, %33 : vector<2x128xf32>
    %35 = math.tanh %29 : vector<2x128xf32>
    %36 = vector.extract_strided_slice %34 {offsets = [0, 0], sizes = [2, 32], strides = [1, 1]} : vector<2x128xf32> to vector<2x32xf32>
    %37 = vector.extract_strided_slice %34 {offsets = [0, 32], sizes = [2, 32], strides = [1, 1]} : vector<2x128xf32> to vector<2x32xf32>
    %38 = vector.extract_strided_slice %35 {offsets = [0, 64], sizes = [2, 32], strides = [1, 1]} : vector<2x128xf32> to vector<2x32xf32>
    %39 = vector.extract_strided_slice %34 {offsets = [0, 96], sizes = [2, 32], strides = [1, 1]} : vector<2x128xf32> to vector<2x32xf32>
    %40 = arith.mulf %37, %22 : vector<2x32xf32>
    %41 = arith.mulf %36, %38 : vector<2x32xf32>
    %42 = arith.addf %40, %41 : vector<2x32xf32>
    %43 = math.tanh %42 : vector<2x32xf32>
    %44 = arith.mulf %39, %43 : vector<2x32xf32>
    %45 = tpu.concatenate %44, %24 in 1 : vector<2x32xf32>, vector<2x32xf32> -> vector<2x64xf32>
    %cst_31 = arith.constant dense<0.000000e+00> : vector<2x128xf32>
    %46 = tpu.matmul %45, %15, %cst_31 {dimension_numbers = #tpu.dot_dimension_numbers<[1], [0], [0], [1], [0, 0, 1, 1], [], []>} : vector<2x64xf32>, vector<64x128xf32>, vector<2x128xf32> -> vector<2x128xf32>
    %47 = arith.addf %46, %18 : vector<2x128xf32>
    %48 = arith.negf %47 : vector<2x128xf32>
    %49 = math.exp %48 : vector<2x128xf32>
    %cst_32 = arith.constant 1.000000e+00 : f32
    %50 = vector.broadcast %cst_32 : f32 to vector<2x128xf32>
    %51 = arith.addf %50, %49 : vector<2x128xf32>
    %52 = arith.divf %50, %51 : vector<2x128xf32>
    %53 = math.tanh %47 : vector<2x128xf32>
    %54 = vector.extract_strided_slice %52 {offsets = [0, 0], sizes = [2, 32], strides = [1, 1]} : vector<2x128xf32> to vector<2x32xf32>
    %55 = vector.extract_strided_slice %52 {offsets = [0, 32], sizes = [2, 32], strides = [1, 1]} : vector<2x128xf32> to vector<2x32xf32>
    %56 = vector.extract_strided_slice %53 {offsets = [0, 64], sizes = [2, 32], strides = [1, 1]} : vector<2x128xf32> to vector<2x32xf32>
    %57 = vector.extract_strided_slice %52 {offsets = [0, 96], sizes = [2, 32], strides = [1, 1]} : vector<2x128xf32> to vector<2x32xf32>
    %58 = arith.mulf %55, %26 : vector<2x32xf32>
    %59 = arith.mulf %54, %56 : vector<2x32xf32>
    %60 = arith.addf %58, %59 : vector<2x32xf32>
    %61 = math.tanh %60 : vector<2x32xf32>
    %62 = arith.mulf %57, %61 : vector<2x32xf32>
    %cst_33 = arith.constant 0.000000e+00 : f32
    %63 = vector.broadcast %cst_33 : f32 to vector<2x32xf32>
    %64 = arith.maximumf %62, %63 : vector<2x32xf32>
    %c0_34 = arith.constant 0 : index
    %c0_35 = arith.constant 0 : index
    %65 = vector.load %arg15[%c0_34, %c0_35] : memref<16x32xf32, #tpu.memory_space<vmem>>, vector<2x32xf32>
    tpu.vector_store %arg15[%c0_34, %c0_35], %64 {strides = array<i32>} : memref<16x32xf32, #tpu.memory_space<vmem>>, vector<2x32xf32>,
    %c2 = arith.constant 2 : index
    %c0_36 = arith.constant 0 : index
    %66 = vector.load %arg14[%c2, %c0_36] : memref<16x128xf32, #tpu.memory_space<vmem>>, vector<2x128xf32>
    %cst_37 = arith.constant dense<0.000000e+00> : vector<2x128xf32>
    %67 = tpu.matmul %44, %14, %cst_37 {dimension_numbers = #tpu.dot_dimension_numbers<[1], [0], [0], [1], [0, 0, 1, 1], [], []>} : vector<2x32xf32>, vector<32x128xf32>, vector<2x128xf32> -> vector<2x128xf32>
    %68 = arith.addf %66, %67 : vector<2x128xf32>
    %69 = arith.negf %68 : vector<2x128xf32>
    %70 = math.exp %69 : vector<2x128xf32>
    %cst_38 = arith.constant 1.000000e+00 : f32
    %71 = vector.broadcast %cst_38 : f32 to vector<2x128xf32>
    %72 = arith.addf %71, %70 : vector<2x128xf32>
    %73 = arith.divf %71, %72 : vector<2x128xf32>
    %74 = math.tanh %68 : vector<2x128xf32>
    %75 = vector.extract_strided_slice %73 {offsets = [0, 0], sizes = [2, 32], strides = [1, 1]} : vector<2x128xf32> to vector<2x32xf32>
    %76 = vector.extract_strided_slice %73 {offsets = [0, 32], sizes = [2, 32], strides = [1, 1]} : vector<2x128xf32> to vector<2x32xf32>
    %77 = vector.extract_strided_slice %74 {offsets = [0, 64], sizes = [2, 32], strides = [1, 1]} : vector<2x128xf32> to vector<2x32xf32>
    %78 = vector.extract_strided_slice %73 {offsets = [0, 96], sizes = [2, 32], strides = [1, 1]} : vector<2x128xf32> to vector<2x32xf32>
    %79 = arith.mulf %76, %42 : vector<2x32xf32>
    %80 = arith.mulf %75, %77 : vector<2x32xf32>
    %81 = arith.addf %79, %80 : vector<2x32xf32>
    %82 = math.tanh %81 : vector<2x32xf32>
    %83 = arith.mulf %78, %82 : vector<2x32xf32>
    %84 = tpu.concatenate %83, %62 in 1 : vector<2x32xf32>, vector<2x32xf32> -> vector<2x64xf32>
    %cst_39 = arith.constant dense<0.000000e+00> : vector<2x128xf32>
    %85 = tpu.matmul %84, %15, %cst_39 {dimension_numbers = #tpu.dot_dimension_numbers<[1], [0], [0], [1], [0, 0, 1, 1], [], []>} : vector<2x64xf32>, vector<64x128xf32>, vector<2x128xf32> -> vector<2x128xf32>
    %86 = arith.addf %85, %18 : vector<2x128xf32>
    %87 = arith.negf %86 : vector<2x128xf32>
    %88 = math.exp %87 : vector<2x128xf32>
    %cst_40 = arith.constant 1.000000e+00 : f32
    %89 = vector.broadcast %cst_40 : f32 to vector<2x128xf32>
    %90 = arith.addf %89, %88 : vector<2x128xf32>
    %91 = arith.divf %89, %90 : vector<2x128xf32>
    %92 = math.tanh %86 : vector<2x128xf32>
    %93 = vector.extract_strided_slice %91 {offsets = [0, 0], sizes = [2, 32], strides = [1, 1]} : vector<2x128xf32> to vector<2x32xf32>
    %94 = vector.extract_strided_slice %91 {offsets = [0, 32], sizes = [2, 32], strides = [1, 1]} : vector<2x128xf32> to vector<2x32xf32>
    %95 = vector.extract_strided_slice %92 {offsets = [0, 64], sizes = [2, 32], strides = [1, 1]} : vector<2x128xf32> to vector<2x32xf32>
    %96 = vector.extract_strided_slice %91 {offsets = [0, 96], sizes = [2, 32], strides = [1, 1]} : vector<2x128xf32> to vector<2x32xf32>
    %97 = arith.mulf %94, %60 : vector<2x32xf32>
    %98 = arith.mulf %93, %95 : vector<2x32xf32>
    %99 = arith.addf %97, %98 : vector<2x32xf32>
    %100 = math.tanh %99 : vector<2x32xf32>
    %101 = arith.mulf %96, %100 : vector<2x32xf32>
    %cst_41 = arith.constant 0.000000e+00 : f32
    %102 = vector.broadcast %cst_41 : f32 to vector<2x32xf32>
    %103 = arith.maximumf %101, %102 : vector<2x32xf32>
    %c2_42 = arith.constant 2 : index
    %c0_43 = arith.constant 0 : index
    %104 = vector.load %arg15[%c2_42, %c0_43] : memref<16x32xf32, #tpu.memory_space<vmem>>, vector<2x32xf32>
    tpu.vector_store %arg15[%c2_42, %c0_43], %103 {strides = array<i32>} : memref<16x32xf32, #tpu.memory_space<vmem>>, vector<2x32xf32>,
    %c4 = arith.constant 4 : index
    %c0_44 = arith.constant 0 : index
    %105 = vector.load %arg14[%c4, %c0_44] : memref<16x128xf32, #tpu.memory_space<vmem>>, vector<2x128xf32>
    %cst_45 = arith.constant dense<0.000000e+00> : vector<2x128xf32>
    %106 = tpu.matmul %83, %14, %cst_45 {dimension_numbers = #tpu.dot_dimension_numbers<[1], [0], [0], [1], [0, 0, 1, 1], [], []>} : vector<2x32xf32>, vector<32x128xf32>, vector<2x128xf32> -> vector<2x128xf32>
    %107 = arith.addf %105, %106 : vector<2x128xf32>
    %108 = arith.negf %107 : vector<2x128xf32>
    %109 = math.exp %108 : vector<2x128xf32>
    %cst_46 = arith.constant 1.000000e+00 : f32
    %110 = vector.broadcast %cst_46 : f32 to vector<2x128xf32>
    %111 = arith.addf %110, %109 : vector<2x128xf32>
    %112 = arith.divf %110, %111 : vector<2x128xf32>
    %113 = math.tanh %107 : vector<2x128xf32>
    %114 = vector.extract_strided_slice %112 {offsets = [0, 0], sizes = [2, 32], strides = [1, 1]} : vector<2x128xf32> to vector<2x32xf32>
    %115 = vector.extract_strided_slice %112 {offsets = [0, 32], sizes = [2, 32], strides = [1, 1]} : vector<2x128xf32> to vector<2x32xf32>
    %116 = vector.extract_strided_slice %113 {offsets = [0, 64], sizes = [2, 32], strides = [1, 1]} : vector<2x128xf32> to vector<2x32xf32>
    %117 = vector.extract_strided_slice %112 {offsets = [0, 96], sizes = [2, 32], strides = [1, 1]} : vector<2x128xf32> to vector<2x32xf32>
    %118 = arith.mulf %115, %81 : vector<2x32xf32>
    %119 = arith.mulf %114, %116 : vector<2x32xf32>
    %120 = arith.addf %118, %119 : vector<2x32xf32>
    %121 = math.tanh %120 : vector<2x32xf32>
    %122 = arith.mulf %117, %121 : vector<2x32xf32>
    %123 = tpu.concatenate %122, %101 in 1 : vector<2x32xf32>, vector<2x32xf32> -> vector<2x64xf32>
    %cst_47 = arith.constant dense<0.000000e+00> : vector<2x128xf32>
    %124 = tpu.matmul %123, %15, %cst_47 {dimension_numbers = #tpu.dot_dimension_numbers<[1], [0], [0], [1], [0, 0, 1, 1], [], []>} : vector<2x64xf32>, vector<64x128xf32>, vector<2x128xf32> -> vector<2x128xf32>
    %125 = arith.addf %124, %18 : vector<2x128xf32>
    %126 = arith.negf %125 : vector<2x128xf32>
    %127 = math.exp %126 : vector<2x128xf32>
    %cst_48 = arith.constant 1.000000e+00 : f32
    %128 = vector.broadcast %cst_48 : f32 to vector<2x128xf32>
    %129 = arith.addf %128, %127 : vector<2x128xf32>
    %130 = arith.divf %128, %129 : vector<2x128xf32>
    %131 = math.tanh %125 : vector<2x128xf32>
    %132 = vector.extract_strided_slice %130 {offsets = [0, 0], sizes = [2, 32], strides = [1, 1]} : vector<2x128xf32> to vector<2x32xf32>
    %133 = vector.extract_strided_slice %130 {offsets = [0, 32], sizes = [2, 32], strides = [1, 1]} : vector<2x128xf32> to vector<2x32xf32>
    %134 = vector.extract_strided_slice %131 {offsets = [0, 64], sizes = [2, 32], strides = [1, 1]} : vector<2x128xf32> to vector<2x32xf32>
    %135 = vector.extract_strided_slice %130 {offsets = [0, 96], sizes = [2, 32], strides = [1, 1]} : vector<2x128xf32> to vector<2x32xf32>
    %136 = arith.mulf %133, %99 : vector<2x32xf32>
    %137 = arith.mulf %132, %134 : vector<2x32xf32>
    %138 = arith.addf %136, %137 : vector<2x32xf32>
    %139 = math.tanh %138 : vector<2x32xf32>
    %140 = arith.mulf %135, %139 : vector<2x32xf32>
    %cst_49 = arith.constant 0.000000e+00 : f32
    %141 = vector.broadcast %cst_49 : f32 to vector<2x32xf32>
    %142 = arith.maximumf %140, %141 : vector<2x32xf32>
    %c4_50 = arith.constant 4 : index
    %c0_51 = arith.constant 0 : index
    %143 = vector.load %arg15[%c4_50, %c0_51] : memref<16x32xf32, #tpu.memory_space<vmem>>, vector<2x32xf32>
    tpu.vector_store %arg15[%c4_50, %c0_51], %142 {strides = array<i32>} : memref<16x32xf32, #tpu.memory_space<vmem>>, vector<2x32xf32>,
    %c6 = arith.constant 6 : index
    %c0_52 = arith.constant 0 : index
    %144 = vector.load %arg14[%c6, %c0_52] : memref<16x128xf32, #tpu.memory_space<vmem>>, vector<2x128xf32>
    %cst_53 = arith.constant dense<0.000000e+00> : vector<2x128xf32>
    %145 = tpu.matmul %122, %14, %cst_53 {dimension_numbers = #tpu.dot_dimension_numbers<[1], [0], [0], [1], [0, 0, 1, 1], [], []>} : vector<2x32xf32>, vector<32x128xf32>, vector<2x128xf32> -> vector<2x128xf32>
    %146 = arith.addf %144, %145 : vector<2x128xf32>
    %147 = arith.negf %146 : vector<2x128xf32>
    %148 = math.exp %147 : vector<2x128xf32>
    %cst_54 = arith.constant 1.000000e+00 : f32
    %149 = vector.broadcast %cst_54 : f32 to vector<2x128xf32>
    %150 = arith.addf %149, %148 : vector<2x128xf32>
    %151 = arith.divf %149, %150 : vector<2x128xf32>
    %152 = math.tanh %146 : vector<2x128xf32>
    %153 = vector.extract_strided_slice %151 {offsets = [0, 0], sizes = [2, 32], strides = [1, 1]} : vector<2x128xf32> to vector<2x32xf32>
    %154 = vector.extract_strided_slice %151 {offsets = [0, 32], sizes = [2, 32], strides = [1, 1]} : vector<2x128xf32> to vector<2x32xf32>
    %155 = vector.extract_strided_slice %152 {offsets = [0, 64], sizes = [2, 32], strides = [1, 1]} : vector<2x128xf32> to vector<2x32xf32>
    %156 = vector.extract_strided_slice %151 {offsets = [0, 96], sizes = [2, 32], strides = [1, 1]} : vector<2x128xf32> to vector<2x32xf32>
    %157 = arith.mulf %154, %120 : vector<2x32xf32>
    %158 = arith.mulf %153, %155 : vector<2x32xf32>
    %159 = arith.addf %157, %158 : vector<2x32xf32>
    %160 = math.tanh %159 : vector<2x32xf32>
    %161 = arith.mulf %156, %160 : vector<2x32xf32>
    %162 = tpu.concatenate %161, %140 in 1 : vector<2x32xf32>, vector<2x32xf32> -> vector<2x64xf32>
    %cst_55 = arith.constant dense<0.000000e+00> : vector<2x128xf32>
    %163 = tpu.matmul %162, %15, %cst_55 {dimension_numbers = #tpu.dot_dimension_numbers<[1], [0], [0], [1], [0, 0, 1, 1], [], []>} : vector<2x64xf32>, vector<64x128xf32>, vector<2x128xf32> -> vector<2x128xf32>
    %164 = arith.addf %163, %18 : vector<2x128xf32>
    %165 = arith.negf %164 : vector<2x128xf32>
    %166 = math.exp %165 : vector<2x128xf32>
    %cst_56 = arith.constant 1.000000e+00 : f32
    %167 = vector.broadcast %cst_56 : f32 to vector<2x128xf32>
    %168 = arith.addf %167, %166 : vector<2x128xf32>
    %169 = arith.divf %167, %168 : vector<2x128xf32>
    %170 = math.tanh %164 : vector<2x128xf32>
    %171 = vector.extract_strided_slice %169 {offsets = [0, 0], sizes = [2, 32], strides = [1, 1]} : vector<2x128xf32> to vector<2x32xf32>
    %172 = vector.extract_strided_slice %169 {offsets = [0, 32], sizes = [2, 32], strides = [1, 1]} : vector<2x128xf32> to vector<2x32xf32>
    %173 = vector.extract_strided_slice %170 {offsets = [0, 64], sizes = [2, 32], strides = [1, 1]} : vector<2x128xf32> to vector<2x32xf32>
    %174 = vector.extract_strided_slice %169 {offsets = [0, 96], sizes = [2, 32], strides = [1, 1]} : vector<2x128xf32> to vector<2x32xf32>
    %175 = arith.mulf %172, %138 : vector<2x32xf32>
    %176 = arith.mulf %171, %173 : vector<2x32xf32>
    %177 = arith.addf %175, %176 : vector<2x32xf32>
    %178 = math.tanh %177 : vector<2x32xf32>
    %179 = arith.mulf %174, %178 : vector<2x32xf32>
    %cst_57 = arith.constant 0.000000e+00 : f32
    %180 = vector.broadcast %cst_57 : f32 to vector<2x32xf32>
    %181 = arith.maximumf %179, %180 : vector<2x32xf32>
    %c6_58 = arith.constant 6 : index
    %c0_59 = arith.constant 0 : index
    %182 = vector.load %arg15[%c6_58, %c0_59] : memref<16x32xf32, #tpu.memory_space<vmem>>, vector<2x32xf32>
    tpu.vector_store %arg15[%c6_58, %c0_59], %181 {strides = array<i32>} : memref<16x32xf32, #tpu.memory_space<vmem>>, vector<2x32xf32>,
    %c8 = arith.constant 8 : index
    %c0_60 = arith.constant 0 : index
    %183 = vector.load %arg14[%c8, %c0_60] : memref<16x128xf32, #tpu.memory_space<vmem>>, vector<2x128xf32>
    %cst_61 = arith.constant dense<0.000000e+00> : vector<2x128xf32>
    %184 = tpu.matmul %161, %14, %cst_61 {dimension_numbers = #tpu.dot_dimension_numbers<[1], [0], [0], [1], [0, 0, 1, 1], [], []>} : vector<2x32xf32>, vector<32x128xf32>, vector<2x128xf32> -> vector<2x128xf32>
    %185 = arith.addf %183, %184 : vector<2x128xf32>
    %186 = arith.negf %185 : vector<2x128xf32>
    %187 = math.exp %186 : vector<2x128xf32>
    %cst_62 = arith.constant 1.000000e+00 : f32
    %188 = vector.broadcast %cst_62 : f32 to vector<2x128xf32>
    %189 = arith.addf %188, %187 : vector<2x128xf32>
    %190 = arith.divf %188, %189 : vector<2x128xf32>
    %191 = math.tanh %185 : vector<2x128xf32>
    %192 = vector.extract_strided_slice %190 {offsets = [0, 0], sizes = [2, 32], strides = [1, 1]} : vector<2x128xf32> to vector<2x32xf32>
    %193 = vector.extract_strided_slice %190 {offsets = [0, 32], sizes = [2, 32], strides = [1, 1]} : vector<2x128xf32> to vector<2x32xf32>
    %194 = vector.extract_strided_slice %191 {offsets = [0, 64], sizes = [2, 32], strides = [1, 1]} : vector<2x128xf32> to vector<2x32xf32>
    %195 = vector.extract_strided_slice %190 {offsets = [0, 96], sizes = [2, 32], strides = [1, 1]} : vector<2x128xf32> to vector<2x32xf32>
    %196 = arith.mulf %193, %159 : vector<2x32xf32>
    %197 = arith.mulf %192, %194 : vector<2x32xf32>
    %198 = arith.addf %196, %197 : vector<2x32xf32>
    %199 = math.tanh %198 : vector<2x32xf32>
    %200 = arith.mulf %195, %199 : vector<2x32xf32>
    %201 = tpu.concatenate %200, %179 in 1 : vector<2x32xf32>, vector<2x32xf32> -> vector<2x64xf32>
    %cst_63 = arith.constant dense<0.000000e+00> : vector<2x128xf32>
    %202 = tpu.matmul %201, %15, %cst_63 {dimension_numbers = #tpu.dot_dimension_numbers<[1], [0], [0], [1], [0, 0, 1, 1], [], []>} : vector<2x64xf32>, vector<64x128xf32>, vector<2x128xf32> -> vector<2x128xf32>
    %203 = arith.addf %202, %18 : vector<2x128xf32>
    %204 = arith.negf %203 : vector<2x128xf32>
    %205 = math.exp %204 : vector<2x128xf32>
    %cst_64 = arith.constant 1.000000e+00 : f32
    %206 = vector.broadcast %cst_64 : f32 to vector<2x128xf32>
    %207 = arith.addf %206, %205 : vector<2x128xf32>
    %208 = arith.divf %206, %207 : vector<2x128xf32>
    %209 = math.tanh %203 : vector<2x128xf32>
    %210 = vector.extract_strided_slice %208 {offsets = [0, 0], sizes = [2, 32], strides = [1, 1]} : vector<2x128xf32> to vector<2x32xf32>
    %211 = vector.extract_strided_slice %208 {offsets = [0, 32], sizes = [2, 32], strides = [1, 1]} : vector<2x128xf32> to vector<2x32xf32>
    %212 = vector.extract_strided_slice %209 {offsets = [0, 64], sizes = [2, 32], strides = [1, 1]} : vector<2x128xf32> to vector<2x32xf32>
    %213 = vector.extract_strided_slice %208 {offsets = [0, 96], sizes = [2, 32], strides = [1, 1]} : vector<2x128xf32> to vector<2x32xf32>
    %214 = arith.mulf %211, %177 : vector<2x32xf32>
    %215 = arith.mulf %210, %212 : vector<2x32xf32>
    %216 = arith.addf %214, %215 : vector<2x32xf32>
    %217 = math.tanh %216 : vector<2x32xf32>
    %218 = arith.mulf %213, %217 : vector<2x32xf32>
    %cst_65 = arith.constant 0.000000e+00 : f32
    %219 = vector.broadcast %cst_65 : f32 to vector<2x32xf32>
    %220 = arith.maximumf %218, %219 : vector<2x32xf32>
    %c8_66 = arith.constant 8 : index
    %c0_67 = arith.constant 0 : index
    %221 = vector.load %arg15[%c8_66, %c0_67] : memref<16x32xf32, #tpu.memory_space<vmem>>, vector<2x32xf32>
    tpu.vector_store %arg15[%c8_66, %c0_67], %220 {strides = array<i32>} : memref<16x32xf32, #tpu.memory_space<vmem>>, vector<2x32xf32>,
    %c10 = arith.constant 10 : index
    %c0_68 = arith.constant 0 : index
    %222 = vector.load %arg14[%c10, %c0_68] : memref<16x128xf32, #tpu.memory_space<vmem>>, vector<2x128xf32>
    %cst_69 = arith.constant dense<0.000000e+00> : vector<2x128xf32>
    %223 = tpu.matmul %200, %14, %cst_69 {dimension_numbers = #tpu.dot_dimension_numbers<[1], [0], [0], [1], [0, 0, 1, 1], [], []>} : vector<2x32xf32>, vector<32x128xf32>, vector<2x128xf32> -> vector<2x128xf32>
    %224 = arith.addf %222, %223 : vector<2x128xf32>
    %225 = arith.negf %224 : vector<2x128xf32>
    %226 = math.exp %225 : vector<2x128xf32>
    %cst_70 = arith.constant 1.000000e+00 : f32
    %227 = vector.broadcast %cst_70 : f32 to vector<2x128xf32>
    %228 = arith.addf %227, %226 : vector<2x128xf32>
    %229 = arith.divf %227, %228 : vector<2x128xf32>
    %230 = math.tanh %224 : vector<2x128xf32>
    %231 = vector.extract_strided_slice %229 {offsets = [0, 0], sizes = [2, 32], strides = [1, 1]} : vector<2x128xf32> to vector<2x32xf32>
    %232 = vector.extract_strided_slice %229 {offsets = [0, 32], sizes = [2, 32], strides = [1, 1]} : vector<2x128xf32> to vector<2x32xf32>
    %233 = vector.extract_strided_slice %230 {offsets = [0, 64], sizes = [2, 32], strides = [1, 1]} : vector<2x128xf32> to vector<2x32xf32>
    %234 = vector.extract_strided_slice %229 {offsets = [0, 96], sizes = [2, 32], strides = [1, 1]} : vector<2x128xf32> to vector<2x32xf32>
    %235 = arith.mulf %232, %198 : vector<2x32xf32>
    %236 = arith.mulf %231, %233 : vector<2x32xf32>
    %237 = arith.addf %235, %236 : vector<2x32xf32>
    %238 = math.tanh %237 : vector<2x32xf32>
    %239 = arith.mulf %234, %238 : vector<2x32xf32>
    %240 = tpu.concatenate %239, %218 in 1 : vector<2x32xf32>, vector<2x32xf32> -> vector<2x64xf32>
    %cst_71 = arith.constant dense<0.000000e+00> : vector<2x128xf32>
    %241 = tpu.matmul %240, %15, %cst_71 {dimension_numbers = #tpu.dot_dimension_numbers<[1], [0], [0], [1], [0, 0, 1, 1], [], []>} : vector<2x64xf32>, vector<64x128xf32>, vector<2x128xf32> -> vector<2x128xf32>
    %242 = arith.addf %241, %18 : vector<2x128xf32>
    %243 = arith.negf %242 : vector<2x128xf32>
    %244 = math.exp %243 : vector<2x128xf32>
    %cst_72 = arith.constant 1.000000e+00 : f32
    %245 = vector.broadcast %cst_72 : f32 to vector<2x128xf32>
    %246 = arith.addf %245, %244 : vector<2x128xf32>
    %247 = arith.divf %245, %246 : vector<2x128xf32>
    %248 = math.tanh %242 : vector<2x128xf32>
    %249 = vector.extract_strided_slice %247 {offsets = [0, 0], sizes = [2, 32], strides = [1, 1]} : vector<2x128xf32> to vector<2x32xf32>
    %250 = vector.extract_strided_slice %247 {offsets = [0, 32], sizes = [2, 32], strides = [1, 1]} : vector<2x128xf32> to vector<2x32xf32>
    %251 = vector.extract_strided_slice %248 {offsets = [0, 64], sizes = [2, 32], strides = [1, 1]} : vector<2x128xf32> to vector<2x32xf32>
    %252 = vector.extract_strided_slice %247 {offsets = [0, 96], sizes = [2, 32], strides = [1, 1]} : vector<2x128xf32> to vector<2x32xf32>
    %253 = arith.mulf %250, %216 : vector<2x32xf32>
    %254 = arith.mulf %249, %251 : vector<2x32xf32>
    %255 = arith.addf %253, %254 : vector<2x32xf32>
    %256 = math.tanh %255 : vector<2x32xf32>
    %257 = arith.mulf %252, %256 : vector<2x32xf32>
    %cst_73 = arith.constant 0.000000e+00 : f32
    %258 = vector.broadcast %cst_73 : f32 to vector<2x32xf32>
    %259 = arith.maximumf %257, %258 : vector<2x32xf32>
    %c10_74 = arith.constant 10 : index
    %c0_75 = arith.constant 0 : index
    %260 = vector.load %arg15[%c10_74, %c0_75] : memref<16x32xf32, #tpu.memory_space<vmem>>, vector<2x32xf32>
    tpu.vector_store %arg15[%c10_74, %c0_75], %259 {strides = array<i32>} : memref<16x32xf32, #tpu.memory_space<vmem>>, vector<2x32xf32>,
    %c12 = arith.constant 12 : index
    %c0_76 = arith.constant 0 : index
    %261 = vector.load %arg14[%c12, %c0_76] : memref<16x128xf32, #tpu.memory_space<vmem>>, vector<2x128xf32>
    %cst_77 = arith.constant dense<0.000000e+00> : vector<2x128xf32>
    %262 = tpu.matmul %239, %14, %cst_77 {dimension_numbers = #tpu.dot_dimension_numbers<[1], [0], [0], [1], [0, 0, 1, 1], [], []>} : vector<2x32xf32>, vector<32x128xf32>, vector<2x128xf32> -> vector<2x128xf32>
    %263 = arith.addf %261, %262 : vector<2x128xf32>
    %264 = arith.negf %263 : vector<2x128xf32>
    %265 = math.exp %264 : vector<2x128xf32>
    %cst_78 = arith.constant 1.000000e+00 : f32
    %266 = vector.broadcast %cst_78 : f32 to vector<2x128xf32>
    %267 = arith.addf %266, %265 : vector<2x128xf32>
    %268 = arith.divf %266, %267 : vector<2x128xf32>
    %269 = math.tanh %263 : vector<2x128xf32>
    %270 = vector.extract_strided_slice %268 {offsets = [0, 0], sizes = [2, 32], strides = [1, 1]} : vector<2x128xf32> to vector<2x32xf32>
    %271 = vector.extract_strided_slice %268 {offsets = [0, 32], sizes = [2, 32], strides = [1, 1]} : vector<2x128xf32> to vector<2x32xf32>
    %272 = vector.extract_strided_slice %269 {offsets = [0, 64], sizes = [2, 32], strides = [1, 1]} : vector<2x128xf32> to vector<2x32xf32>
    %273 = vector.extract_strided_slice %268 {offsets = [0, 96], sizes = [2, 32], strides = [1, 1]} : vector<2x128xf32> to vector<2x32xf32>
    %274 = arith.mulf %271, %237 : vector<2x32xf32>
    %275 = arith.mulf %270, %272 : vector<2x32xf32>
    %276 = arith.addf %274, %275 : vector<2x32xf32>
    %277 = math.tanh %276 : vector<2x32xf32>
    %278 = arith.mulf %273, %277 : vector<2x32xf32>
    %279 = tpu.concatenate %278, %257 in 1 : vector<2x32xf32>, vector<2x32xf32> -> vector<2x64xf32>
    %cst_79 = arith.constant dense<0.000000e+00> : vector<2x128xf32>
    %280 = tpu.matmul %279, %15, %cst_79 {dimension_numbers = #tpu.dot_dimension_numbers<[1], [0], [0], [1], [0, 0, 1, 1], [], []>} : vector<2x64xf32>, vector<64x128xf32>, vector<2x128xf32> -> vector<2x128xf32>
    %281 = arith.addf %280, %18 : vector<2x128xf32>
    %282 = arith.negf %281 : vector<2x128xf32>
    %283 = math.exp %282 : vector<2x128xf32>
    %cst_80 = arith.constant 1.000000e+00 : f32
    %284 = vector.broadcast %cst_80 : f32 to vector<2x128xf32>
    %285 = arith.addf %284, %283 : vector<2x128xf32>
    %286 = arith.divf %284, %285 : vector<2x128xf32>
    %287 = math.tanh %281 : vector<2x128xf32>
    %288 = vector.extract_strided_slice %286 {offsets = [0, 0], sizes = [2, 32], strides = [1, 1]} : vector<2x128xf32> to vector<2x32xf32>
    %289 = vector.extract_strided_slice %286 {offsets = [0, 32], sizes = [2, 32], strides = [1, 1]} : vector<2x128xf32> to vector<2x32xf32>
    %290 = vector.extract_strided_slice %287 {offsets = [0, 64], sizes = [2, 32], strides = [1, 1]} : vector<2x128xf32> to vector<2x32xf32>
    %291 = vector.extract_strided_slice %286 {offsets = [0, 96], sizes = [2, 32], strides = [1, 1]} : vector<2x128xf32> to vector<2x32xf32>
    %292 = arith.mulf %289, %255 : vector<2x32xf32>
    %293 = arith.mulf %288, %290 : vector<2x32xf32>
    %294 = arith.addf %292, %293 : vector<2x32xf32>
    %295 = math.tanh %294 : vector<2x32xf32>
    %296 = arith.mulf %291, %295 : vector<2x32xf32>
    %cst_81 = arith.constant 0.000000e+00 : f32
    %297 = vector.broadcast %cst_81 : f32 to vector<2x32xf32>
    %298 = arith.maximumf %296, %297 : vector<2x32xf32>
    %c12_82 = arith.constant 12 : index
    %c0_83 = arith.constant 0 : index
    %299 = vector.load %arg15[%c12_82, %c0_83] : memref<16x32xf32, #tpu.memory_space<vmem>>, vector<2x32xf32>
    tpu.vector_store %arg15[%c12_82, %c0_83], %298 {strides = array<i32>} : memref<16x32xf32, #tpu.memory_space<vmem>>, vector<2x32xf32>,
    %c14 = arith.constant 14 : index
    %c0_84 = arith.constant 0 : index
    %300 = vector.load %arg14[%c14, %c0_84] : memref<16x128xf32, #tpu.memory_space<vmem>>, vector<2x128xf32>
    %cst_85 = arith.constant dense<0.000000e+00> : vector<2x128xf32>
    %301 = tpu.matmul %278, %14, %cst_85 {dimension_numbers = #tpu.dot_dimension_numbers<[1], [0], [0], [1], [0, 0, 1, 1], [], []>} : vector<2x32xf32>, vector<32x128xf32>, vector<2x128xf32> -> vector<2x128xf32>
    %302 = arith.addf %300, %301 : vector<2x128xf32>
    %303 = arith.negf %302 : vector<2x128xf32>
    %304 = math.exp %303 : vector<2x128xf32>
    %cst_86 = arith.constant 1.000000e+00 : f32
    %305 = vector.broadcast %cst_86 : f32 to vector<2x128xf32>
    %306 = arith.addf %305, %304 : vector<2x128xf32>
    %307 = arith.divf %305, %306 : vector<2x128xf32>
    %308 = math.tanh %302 : vector<2x128xf32>
    %309 = vector.extract_strided_slice %307 {offsets = [0, 0], sizes = [2, 32], strides = [1, 1]} : vector<2x128xf32> to vector<2x32xf32>
    %310 = vector.extract_strided_slice %307 {offsets = [0, 32], sizes = [2, 32], strides = [1, 1]} : vector<2x128xf32> to vector<2x32xf32>
    %311 = vector.extract_strided_slice %308 {offsets = [0, 64], sizes = [2, 32], strides = [1, 1]} : vector<2x128xf32> to vector<2x32xf32>
    %312 = vector.extract_strided_slice %307 {offsets = [0, 96], sizes = [2, 32], strides = [1, 1]} : vector<2x128xf32> to vector<2x32xf32>
    %313 = arith.mulf %310, %276 : vector<2x32xf32>
    %314 = arith.mulf %309, %311 : vector<2x32xf32>
    %315 = arith.addf %313, %314 : vector<2x32xf32>
    %316 = math.tanh %315 : vector<2x32xf32>
    %317 = arith.mulf %312, %316 : vector<2x32xf32>
    %318 = tpu.concatenate %317, %296 in 1 : vector<2x32xf32>, vector<2x32xf32> -> vector<2x64xf32>
    %cst_87 = arith.constant dense<0.000000e+00> : vector<2x128xf32>
    %319 = tpu.matmul %318, %15, %cst_87 {dimension_numbers = #tpu.dot_dimension_numbers<[1], [0], [0], [1], [0, 0, 1, 1], [], []>} : vector<2x64xf32>, vector<64x128xf32>, vector<2x128xf32> -> vector<2x128xf32>
    %320 = arith.addf %319, %18 : vector<2x128xf32>
    %321 = arith.negf %320 : vector<2x128xf32>
    %322 = math.exp %321 : vector<2x128xf32>
    %cst_88 = arith.constant 1.000000e+00 : f32
    %323 = vector.broadcast %cst_88 : f32 to vector<2x128xf32>
    %324 = arith.addf %323, %322 : vector<2x128xf32>
    %325 = arith.divf %323, %324 : vector<2x128xf32>
    %326 = math.tanh %320 : vector<2x128xf32>
    %327 = vector.extract_strided_slice %325 {offsets = [0, 0], sizes = [2, 32], strides = [1, 1]} : vector<2x128xf32> to vector<2x32xf32>
    %328 = vector.extract_strided_slice %325 {offsets = [0, 32], sizes = [2, 32], strides = [1, 1]} : vector<2x128xf32> to vector<2x32xf32>
    %329 = vector.extract_strided_slice %326 {offsets = [0, 64], sizes = [2, 32], strides = [1, 1]} : vector<2x128xf32> to vector<2x32xf32>
    %330 = vector.extract_strided_slice %325 {offsets = [0, 96], sizes = [2, 32], strides = [1, 1]} : vector<2x128xf32> to vector<2x32xf32>
    %331 = arith.mulf %328, %294 : vector<2x32xf32>
    %332 = arith.mulf %327, %329 : vector<2x32xf32>
    %333 = arith.addf %331, %332 : vector<2x32xf32>
    %334 = math.tanh %333 : vector<2x32xf32>
    %335 = arith.mulf %330, %334 : vector<2x32xf32>
    %cst_89 = arith.constant 0.000000e+00 : f32
    %336 = vector.broadcast %cst_89 : f32 to vector<2x32xf32>
    %337 = arith.maximumf %335, %336 : vector<2x32xf32>
    %c14_90 = arith.constant 14 : index
    %c0_91 = arith.constant 0 : index
    %338 = vector.load %arg15[%c14_90, %c0_91] : memref<16x32xf32, #tpu.memory_space<vmem>>, vector<2x32xf32>
    tpu.vector_store %arg15[%c14_90, %c0_91], %337 {strides = array<i32>} : memref<16x32xf32, #tpu.memory_space<vmem>>, vector<2x32xf32>,
    %c0_92 = arith.constant 0 : index
    %c0_93 = arith.constant 0 : index
    %c0_94 = arith.constant 0 : index
    %339 = vector.load %arg12[%c0_92, %c0_93, %c0_94] : memref<2x2x32xf32, #tpu.memory_space<vmem>>, vector<1x2x32xf32>
    %340 = vector.shape_cast %339 : vector<1x2x32xf32> to vector<2x32xf32>
    %341 = vector.shape_cast %317 : vector<2x32xf32> to vector<1x2x32xf32>
    tpu.vector_store %arg12[%c0_92, %c0_93, %c0_94], %341 {strides = array<i32>} : memref<2x2x32xf32, #tpu.memory_space<vmem>>, vector<1x2x32xf32>,
    %c1_95 = arith.constant 1 : index
    %c0_96 = arith.constant 0 : index
    %c0_97 = arith.constant 0 : index
    %342 = vector.load %arg12[%c1_95, %c0_96, %c0_97] : memref<2x2x32xf32, #tpu.memory_space<vmem>>, vector<1x2x32xf32>
    %343 = vector.shape_cast %342 : vector<1x2x32xf32> to vector<2x32xf32>
    %344 = vector.shape_cast %335 : vector<2x32xf32> to vector<1x2x32xf32>
    tpu.vector_store %arg12[%c1_95, %c0_96, %c0_97], %344 {strides = array<i32>} : memref<2x2x32xf32, #tpu.memory_space<vmem>>, vector<1x2x32xf32>,
    %c0_98 = arith.constant 0 : index
    %c0_99 = arith.constant 0 : index
    %c0_100 = arith.constant 0 : index
    %345 = vector.load %arg13[%c0_98, %c0_99, %c0_100] : memref<2x2x32xf32, #tpu.memory_space<vmem>>, vector<1x2x32xf32>
    %346 = vector.shape_cast %345 : vector<1x2x32xf32> to vector<2x32xf32>
    %347 = vector.shape_cast %315 : vector<2x32xf32> to vector<1x2x32xf32>
    tpu.vector_store %arg13[%c0_98, %c0_99, %c0_100], %347 {strides = array<i32>} : memref<2x2x32xf32, #tpu.memory_space<vmem>>, vector<1x2x32xf32>,
    %c1_101 = arith.constant 1 : index
    %c0_102 = arith.constant 0 : index
    %c0_103 = arith.constant 0 : index
    %348 = vector.load %arg13[%c1_101, %c0_102, %c0_103] : memref<2x2x32xf32, #tpu.memory_space<vmem>>, vector<1x2x32xf32>
    %349 = vector.shape_cast %348 : vector<1x2x32xf32> to vector<2x32xf32>
    %350 = vector.shape_cast %333 : vector<2x32xf32> to vector<1x2x32xf32>
    tpu.vector_store %arg13[%c1_101, %c0_102, %c0_103], %350 {strides = array<i32>} : memref<2x2x32xf32, #tpu.memory_space<vmem>>, vector<1x2x32xf32>,
    %c0_104 = arith.constant 0 : index
    %c0_105 = arith.constant 0 : index
    %351 = vector.load %arg15[%c0_104, %c0_105] : memref<16x32xf32, #tpu.memory_space<vmem>>, vector<16x32xf32>
    %c0_106 = arith.constant 0 : index
    %c0_107 = arith.constant 0 : index
    %352 = vector.load %arg9[%c0_106, %c0_107] : memref<32x128xf32, #tpu.memory_space<vmem>>, vector<32x128xf32>
    %cst_108 = arith.constant dense<0.000000e+00> : vector<16x128xf32>
    %353 = tpu.matmul %351, %352, %cst_108 {dimension_numbers = #tpu.dot_dimension_numbers<[1], [0], [0], [1], [0, 0, 1, 1], [], []>} : vector<16x32xf32>, vector<32x128xf32>, vector<16x128xf32> -> vector<16x128xf32>
    %c0_109 = arith.constant 0 : index
    %c0_110 = arith.constant 0 : index
    %354 = vector.load %arg10[%c0_109, %c0_110] : memref<1x128xf32, #tpu.memory_space<vmem>>, vector<1x128xf32>
    %355 = vector.broadcast %354 : vector<1x128xf32> to vector<16x128xf32>
    %356 = arith.addf %353, %355 : vector<16x128xf32>
    %c0_111 = arith.constant 0 : index
    %c0_112 = arith.constant 0 : index
    %357 = vector.load %arg11[%c0_111, %c0_112] : memref<16x128xf32, #tpu.memory_space<vmem>>, vector<16x128xf32>
    tpu.vector_store %arg11[%c0_111, %c0_112], %356 {strides = array<i32>} : memref<16x128xf32, #tpu.memory_space<vmem>>, vector<16x128xf32>,
    return
  }
}

</mosaic_0001>

<llo_original>
// kernel: onehotnet_forward.1
$region0: #{onehotnet_forward.1}
  #allocation0 [shape = 'u32[]', space=smem, size = 0x4, offset = 0x4, fixed_abs, tag = 'smem constant byte address 0x4 - core index']
  #allocation1 [shape = 'u32[144,128]{1,0:T(1,128)}', space=vmem, size = 0x12000, scoped, tag = 'internal scratch']
  #allocation2 [shape = 'f32[16,128]{1,0:T(8,128)}', space=vmem, size = 0x2000, scoped, tag = 'scratch operand']
  #allocation3 [shape = 'f32[16,32]{1,0:T(8,128)}', space=vmem, size = 0x2000, scoped, tag = 'scratch operand']
  %s0 = inlined_call_operand.vmem [shape: s32[16,1], index: 0, kind: input, shape index: {}]
  %s1 = inlined_call_operand.vmem [shape: f32[2,2,32], index: 1, kind: input, shape index: {}]
  %s2 = inlined_call_operand.vmem [shape: f32[2,2,32], index: 2, kind: input, shape index: {}]
  %s3 = inlined_call_operand.vmem [shape: f32[128,16], index: 3, kind: input, shape index: {}]
  %s4 = inlined_call_operand.vmem [shape: f32[16,128], index: 4, kind: input, shape index: {}]
  %s5 = inlined_call_operand.vmem [shape: f32[32,128], index: 5, kind: input, shape index: {}]
  %s6 = inlined_call_operand.vmem [shape: f32[1,128], index: 6, kind: input, shape index: {}]
  %s7 = inlined_call_operand.vmem [shape: f32[64,128], index: 7, kind: input, shape index: {}]
  %s8 = inlined_call_operand.vmem [shape: f32[1,128], index: 8, kind: input, shape index: {}]
  %s9 = inlined_call_operand.vmem [shape: f32[32,128], index: 9, kind: input, shape index: {}]
  %s10 = inlined_call_operand.vmem [shape: f32[1,128], index: 10, kind: input, shape index: {}]
  %s11 = inlined_call_operand.vmem [shape: f32[16,128], index: 11, kind: output, shape index: {0}]
  %s12 = inlined_call_operand.hbm [shape: f32[2,2,32], index: 12, kind: output, shape index: {1}]
  %s13 = inlined_call_operand.hbm [shape: f32[2,2,32], index: 13, kind: output, shape index: {2}]
  %14 = xla_tuple %s11, %s12, %s13
  %s15 = sld [smem:[#allocation0]]
  $region70: #{onehotnet_forward.1} parent=0
    _
  %s17 = ssub.s32 1, %s15
  %s18 = scalar_select 0, %s17, %s15
  $region1: #{onehotnet_forward.1} parent=0
    #allocation4 [shape = 'u8[2048]{0}', space=vmem, size = 0x800, scoped, tag = 'output window, operand 1, single buffered']
    #allocation5 [shape = 's32[1]{0}', space=sflag, size = 0x4, scoped, tag = 'scoped memory for onehotnet_forward.1']
    #allocation6 [shape = 'u8[2048]{0}', space=vmem, size = 0x800, scoped, tag = 'output window, operand 2, single buffered']
    #allocation7 [shape = 's32[1]{0}', space=sflag, size = 0x4, scoped, tag = 'scoped memory for onehotnet_forward.1']
    %19 = vsyncpa [#allocation5], 0
    %20 = vsyncpa [#allocation7], 0
    // Predicated region
    $region2: #{onehotnet_forward.1} parent=1 // pred_check
      _
    $region3: #{onehotnet_forward.1} parent=1 // pred_check_branch
      %22 = sbr.rel (0) target = $region5
    $region4: #{onehotnet_forward.1} parent=1 // pred_region
      _
    $region5: #{onehotnet_forward.1} parent=1 // pred_fallthru
      _
    // Predicated region
    $region6: #{onehotnet_forward.1} parent=1 // pred_check
      _
    $region7: #{onehotnet_forward.1} parent=1 // pred_check_branch
      %24 = sbr.rel (0) target = $region9
    $region8: #{onehotnet_forward.1} parent=1 // pred_region
      _
    $region9: #{onehotnet_forward.1} parent=1 // pred_fallthru
      _
    // Predicated region
    $region10: #{onehotnet_forward.1} parent=1 // pred_check
      _
    $region11: #{onehotnet_forward.1} parent=1 // pred_check_branch
      %26 = sbr.rel (0) target = $region13
    $region12: #{onehotnet_forward.1} parent=1 // pred_region
      _
    $region13: #{onehotnet_forward.1} parent=1 // pred_fallthru
      _
    // Predicated region
    $region14: #{onehotnet_forward.1} parent=1 // pred_check
      _
    $region15: #{onehotnet_forward.1} parent=1 // pred_check_branch
      %28 = sbr.rel (0) target = $region17
    $region16: #{onehotnet_forward.1} parent=1 // pred_region
      _
    $region17: #{onehotnet_forward.1} parent=1 // pred_fallthru
      _
    // Predicated region
    $region18: #{onehotnet_forward.1} parent=1 // pred_check
      _
    $region19: #{onehotnet_forward.1} parent=1 // pred_check_branch
      %30 = sbr.rel (0) target = $region21
    $region20: #{onehotnet_forward.1} parent=1 // pred_region
      _
    $region21: #{onehotnet_forward.1} parent=1 // pred_fallthru
      _
    // Predicated region
    $region22: #{onehotnet_forward.1} parent=1 // pred_check
      _
    $region23: #{onehotnet_forward.1} parent=1 // pred_check_branch
      %32 = sbr.rel (0) target = $region25
    $region24: #{onehotnet_forward.1} parent=1 // pred_region
      _
    $region25: #{onehotnet_forward.1} parent=1 // pred_fallthru
      _
    // Predicated region
    $region26: #{onehotnet_forward.1} parent=1 // pred_check
      _
    $region27: #{onehotnet_forward.1} parent=1 // pred_check_branch
      %34 = sbr.rel (0) target = $region29
    $region28: #{onehotnet_forward.1} parent=1 // pred_region
      _
    $region29: #{onehotnet_forward.1} parent=1 // pred_fallthru
      _
    // Predicated region
    $region30: #{onehotnet_forward.1} parent=1 // pred_check
      _
    $region31: #{onehotnet_forward.1} parent=1 // pred_check_branch
      %36 = sbr.rel (0) target = $region33
    $region32: #{onehotnet_forward.1} parent=1 // pred_region
      _
    $region33: #{onehotnet_forward.1} parent=1 // pred_fallthru
      _
    // Predicated region
    $region34: #{onehotnet_forward.1} parent=1 // pred_check
      _
    $region35: #{onehotnet_forward.1} parent=1 // pred_check_branch
      %38 = sbr.rel (0) target = $region37
    $region36: #{onehotnet_forward.1} parent=1 // pred_region
      _
    $region37: #{onehotnet_forward.1} parent=1 // pred_fallthru
      _
    // Predicated region
    $region38: #{onehotnet_forward.1} parent=1 // pred_check
      _
    $region39: #{onehotnet_forward.1} parent=1 // pred_check_branch
      %40 = sbr.rel (0) target = $region41
    $region40: #{onehotnet_forward.1} parent=1 // pred_region
      _
    $region41: #{onehotnet_forward.1} parent=1 // pred_fallthru
      _
    // Predicated region
    $region42: #{onehotnet_forward.1} parent=1 // pred_check
      _
    $region43: #{onehotnet_forward.1} parent=1 // pred_check_branch
      %42 = sbr.rel (0) target = $region45
    $region44: #{onehotnet_forward.1} parent=1 // pred_region
      _
    $region45: #{onehotnet_forward.1} parent=1 // pred_fallthru
      _
    %v43 = vld [vmem:[%s0] sm:$0xff]
    %v44 = vld [vmem:[%s0 + $0x8] sm:$0xff]
    %v45 = vlaneseq
    %v46 = vand.u32 %v45, 127
    %47 = vset.pattern.permute.xlu0 0
    %48 = vperm.xlu0 %47, %v43
    %v49 = vpop.permute.xlu0 %48
    %50 = vset.pattern.permute.xlu0 0
    %51 = vperm.xlu0 %50, %v44
    %v52 = vpop.permute.xlu0 %51
    %vm53 = vcmp.eq.s32.totalorder %v46, %v49
    %vm54 = vcmp.eq.s32.totalorder %v46, %v52
    %v55 = vsel %vm53, 1, 0
    %v56 = vsel %vm54, 1, 0
    %v57 = vcvt.s32.f32 %v55
    %v58 = vcvt.s32.f32 %v56
    %v59 = vld [vmem:[%s3] sm:$0xff]
    %v60 = vld [vmem:[%s3 + $0x8] sm:$0xff]
    %v61 = vld [vmem:[%s3 + $0x10] sm:$0xff]
    %v62 = vld [vmem:[%s3 + $0x18] sm:$0xff]
    %v63 = vld [vmem:[%s3 + $0x20] sm:$0xff]
    %v64 = vld [vmem:[%s3 + $0x28] sm:$0xff]
    %v65 = vld [vmem:[%s3 + $0x30] sm:$0xff]
    %v66 = vld [vmem:[%s3 + $0x38] sm:$0xff]
    %v67 = vld [vmem:[%s3 + $0x40] sm:$0xff]
    %v68 = vld [vmem:[%s3 + $0x48] sm:$0xff]
    %v69 = vld [vmem:[%s3 + $0x50] sm:$0xff]
    %v70 = vld [vmem:[%s3 + $0x58] sm:$0xff]
    %v71 = vld [vmem:[%s3 + $0x60] sm:$0xff]
    %v72 = vld [vmem:[%s3 + $0x68] sm:$0xff]
    %v73 = vld [vmem:[%s3 + $0x70] sm:$0xff]
    %v74 = vld [vmem:[%s3 + $0x78] sm:$0xff]
    %75 = vmatprep.subr.mxu0 0.0
    %76 = vmatpush1.msra.mxu0 %v59
    %77 = vmatprep.subr.mxu0 0.0
    %78 = vmatpush1.msra.mxu0 %v60
    %79 = vmatprep.subr.mxu0 0.0
    %80 = vmatpush1.msra.mxu0 %v61
    %81 = vmatprep.subr.mxu0 0.0
    %82 = vmatpush1.msra.mxu0 %v62
    %83 = vmatprep.subr.mxu0 0.0
    %84 = vmatpush1.msra.mxu0 %v63
    %85 = vmatprep.subr.mxu0 0.0
    %86 = vmatpush1.msra.mxu0 %v64
    %87 = vmatprep.subr.mxu0 0.0
    %88 = vmatpush1.msra.mxu0 %v65
    %89 = vmatprep.subr.mxu0 0.0
    %90 = vmatpush1.msra.mxu0 %v66
    %91 = vmatprep.subr.mxu0 0.0
    %92 = vmatpush1.msra.mxu0 %v67
    %93 = vmatprep.subr.mxu0 0.0
    %94 = vmatpush1.msra.mxu0 %v68
    %95 = vmatprep.subr.mxu0 0.0
    %96 = vmatpush1.msra.mxu0 %v69
    %97 = vmatprep.subr.mxu0 0.0
    %98 = vmatpush1.msra.mxu0 %v70
    %99 = vmatprep.subr.mxu0 0.0
    %100 = vmatpush1.msra.mxu0 %v71
    %101 = vmatprep.subr.mxu0 0.0
    %102 = vmatpush1.msra.mxu0 %v72
    %103 = vmatprep.subr.mxu0 0.0
    %104 = vmatpush1.msra.mxu0 %v73
    %105 = vmatprep.subr.mxu0 0.0
    %106 = vmatpush1.msra.mxu0 %v74
    %107 = vmatprep.subr.mxu0 0.0
    %108 = vmatpush1.msra.mxu0 0.0
    %109 = vmatprep.subr.mxu0 0.0
    %110 = vmatpush1.msra.mxu0 0.0
    %111 = vmatprep.subr.mxu0 0.0
    %112 = vmatpush1.msra.mxu0 0.0
    %113 = vmatprep.subr.mxu0 0.0
    %114 = vmatpush1.msra.mxu0 0.0
    %115 = vmatprep.subr.mxu0 0.0
    %116 = vmatpush1.msra.mxu0 0.0
    %117 = vmatprep.subr.mxu0 0.0
    %118 = vmatpush1.msra.mxu0 0.0
    %119 = vmatprep.subr.mxu0 0.0
    %120 = vmatpush1.msra.mxu0 0.0
    %121 = vmatprep.subr.mxu0 0.0
    %122 = vmatpush1.msra.mxu0 0.0
    %123 = vmatprep.subr.mxu0 0.0
    %124 = vmatpush1.msra.mxu0 0.0
    %125 = vmatprep.subr.mxu0 0.0
    %126 = vmatpush1.msra.mxu0 0.0
    %127 = vmatprep.subr.mxu0 0.0
    %128 = vmatpush1.msra.mxu0 0.0
    %129 = vmatprep.subr.mxu0 0.0
    %130 = vmatpush1.msra.mxu0 0.0
    %131 = vmatprep.subr.mxu0 0.0
    %132 = vmatpush1.msra.mxu0 0.0
    %133 = vmatprep.subr.mxu0 0.0
    %134 = vmatpush1.msra.mxu0 0.0
    %135 = vmatprep.subr.mxu0 0.0
    %136 = vmatpush1.msra.mxu0 0.0
    %137 = vmatprep.subr.mxu0 0.0
    %138 = vmatpush1.msra.mxu0 0.0
    %139 = vmatprep.mubr.f32.mxu0 0.0
    %140 = vmatmul.mubr.f32.gmra.mrb[0].mxu0 %v57
    %v141 = vpop.f32.mrb[0].mxu0
    %v142 = vadd.f32 0.0, %v141
    %v143 = vpop.f32.mrb[0].mxu0
    %144 = vmatprep.mubr.f32.mxu0 0.0
    %145 = vmatmul.mubr.f32.gmra.mrb[0].mxu0 %v58
    %v146 = vpop.f32.mrb[0].mxu0
    %v147 = vadd.f32 0.0, %v146
    %v148 = vpop.f32.mrb[0].mxu0
    %149 = vdwg.mxu0
    %v150 = vld [vmem:[%s4] sm:$0xff]
    %v151 = vld [vmem:[%s4 + $0x8] sm:$0xff]
    %v152 = vld [vmem:[%s6] sm:$0x1]
    %v154 = vlaneseq
    %v155 = vshrl.u32 %v154, 7
    %v156 = vsub.s32 0, %v155
    %v157 = vrot.slane %v152, %v156
    %vm159 = vcmask 130048
    %v161 = vsel %vm159, %v142, 0
    %v164 = vsel %vm159, %v147, 0
    %166 = vmatprep.subr.mxu0 0.0
    %167 = vmatpush1.msra.mxu0 %v150
    %168 = vmatprep.subr.mxu0 0.0
    %169 = vmatpush1.msra.mxu0 %v151
    %170 = vmatprep.subr.mxu0 0.0
    %171 = vmatpush1.msra.mxu0 0.0
    %172 = vmatprep.subr.mxu0 0.0
    %173 = vmatpush1.msra.mxu0 0.0
    %174 = vmatprep.subr.mxu0 0.0
    %175 = vmatpush1.msra.mxu0 0.0
    %176 = vmatprep.subr.mxu0 0.0
    %177 = vmatpush1.msra.mxu0 0.0
    %178 = vmatprep.subr.mxu0 0.0
    %179 = vmatpush1.msra.mxu0 0.0
    %180 = vmatprep.subr.mxu0 0.0
    %181 = vmatpush1.msra.mxu0 0.0
    %182 = vmatprep.subr.mxu0 0.0
    %183 = vmatpush1.msra.mxu0 0.0
    %184 = vmatprep.subr.mxu0 0.0
    %185 = vmatpush1.msra.mxu0 0.0
    %186 = vmatprep.subr.mxu0 0.0
    %187 = vmatpush1.msra.mxu0 0.0
    %188 = vmatprep.subr.mxu0 0.0
    %189 = vmatpush1.msra.mxu0 0.0
    %190 = vmatprep.subr.mxu0 0.0
    %191 = vmatpush1.msra.mxu0 0.0
    %192 = vmatprep.subr.mxu0 0.0
    %193 = vmatpush1.msra.mxu0 0.0
    %194 = vmatprep.subr.mxu0 0.0
    %195 = vmatpush1.msra.mxu0 0.0
    %196 = vmatprep.subr.mxu0 0.0
    %197 = vmatpush1.msra.mxu0 0.0
    %198 = vmatprep.subr.mxu0 0.0
    %199 = vmatpush1.msra.mxu0 0.0
    %200 = vmatprep.subr.mxu0 0.0
    %201 = vmatpush1.msra.mxu0 0.0
    %202 = vmatprep.subr.mxu0 0.0
    %203 = vmatpush1.msra.mxu0 0.0
    %204 = vmatprep.subr.mxu0 0.0
    %205 = vmatpush1.msra.mxu0 0.0
    %206 = vmatprep.subr.mxu0 0.0
    %207 = vmatpush1.msra.mxu0 0.0
    %208 = vmatprep.subr.mxu0 0.0
    %209 = vmatpush1.msra.mxu0 0.0
    %210 = vmatprep.subr.mxu0 0.0
    %211 = vmatpush1.msra.mxu0 0.0
    %212 = vmatprep.subr.mxu0 0.0
    %213 = vmatpush1.msra.mxu0 0.0
    %214 = vmatprep.subr.mxu0 0.0
    %215 = vmatpush1.msra.mxu0 0.0
    %216 = vmatprep.subr.mxu0 0.0
    %217 = vmatpush1.msra.mxu0 0.0
    %218 = vmatprep.subr.mxu0 0.0
    %219 = vmatpush1.msra.mxu0 0.0
    %220 = vmatprep.subr.mxu0 0.0
    %221 = vmatpush1.msra.mxu0 0.0
    %222 = vmatprep.subr.mxu0 0.0
    %223 = vmatpush1.msra.mxu0 0.0
    %224 = vmatprep.subr.mxu0 0.0
    %225 = vmatpush1.msra.mxu0 0.0
    %226 = vmatprep.subr.mxu0 0.0
    %227 = vmatpush1.msra.mxu0 0.0
    %228 = vmatprep.subr.mxu0 0.0
    %229 = vmatpush1.msra.mxu0 0.0
    %230 = vmatprep.mubr.f32.mxu0 0.0
    %231 = vmatmul.mubr.f32.gmra.mrb[0].mxu0 %v161
    %v232 = vpop.f32.mrb[0].mxu0
    %v233 = vadd.f32 %v157, %v232
    %v234 = vpop.f32.mrb[0].mxu0
    %235 = vmatprep.mubr.f32.mxu0 0.0
    %236 = vmatmul.mubr.f32.gmra.mrb[0].mxu0 %v164
    %v237 = vpop.f32.mrb[0].mxu0
    %v238 = vadd.f32 %v157, %v237
    %v239 = vpop.f32.mrb[0].mxu0
    %240 = vdwg.mxu0
    %241 = vst [vmem:[#allocation2] sm:$0xff] %v233
    %242 = vst [vmem:[#allocation2 + $0x8] sm:$0xff] %v238
    %v243 = vld [vmem:[%s5] sm:$0xff]
    %v244 = vld [vmem:[%s5 + $0x8] sm:$0xff]
    %v245 = vld [vmem:[%s5 + $0x10] sm:$0xff]
    %v246 = vld [vmem:[%s5 + $0x18] sm:$0xff]
    %v247 = vld [vmem:[%s7] sm:$0xff]
    %v248 = vld [vmem:[%s7 + $0x8] sm:$0xff]
    %v249 = vld [vmem:[%s7 + $0x10] sm:$0xff]
    %v250 = vld [vmem:[%s7 + $0x18] sm:$0xff]
    %v251 = vld [vmem:[%s7 + $0x20] sm:$0xff]
    %v252 = vld [vmem:[%s7 + $0x28] sm:$0xff]
    %v253 = vld [vmem:[%s7 + $0x30] sm:$0xff]
    %v254 = vld [vmem:[%s7 + $0x38] sm:$0xff]
    %v255 = vld [vmem:[%s8] sm:$0x1]
    %v257 = vlaneseq
    %v258 = vshrl.u32 %v257, 7
    %v259 = vsub.s32 0, %v258
    %v260 = vrot.slane %v255, %v259
    %v262 = vld [vmem:[%s1] sm:$0x3]
    %v263 = vld [vmem:[%s2] sm:$0x3]
    %s264 = scalar_lea.vmem %s1, 2
    %v265 = vld [vmem:[%s264] sm:$0x3]
    %s266 = scalar_lea.vmem %s2, 2
    %v267 = vld [vmem:[%s266] sm:$0x3]
    %v268 = vld [vmem:[#allocation2] sm:$0x3]
    %vm269 = vcmask 261120
    %v271 = vsel %vm269, %v262, 0
    %273 = vmatprep.subr.mxu0 0.0
    %274 = vmatpush1.msra.mxu0 %v243
    %275 = vmatprep.subr.mxu0 0.0
    %276 = vmatpush1.msra.mxu0 %v244
    %277 = vmatprep.subr.mxu0 0.0
    %278 = vmatpush1.msra.mxu0 %v245
    %279 = vmatprep.subr.mxu0 0.0
    %280 = vmatpush1.msra.mxu0 %v246
    %281 = vmatprep.subr.mxu0 0.0
    %282 = vmatpush1.msra.mxu0 0.0
    %283 = vmatprep.subr.mxu0 0.0
    %284 = vmatpush1.msra.mxu0 0.0
    %285 = vmatprep.subr.mxu0 0.0
    %286 = vmatpush1.msra.mxu0 0.0
    %287 = vmatprep.subr.mxu0 0.0
    %288 = vmatpush1.msra.mxu0 0.0
    %289 = vmatprep.subr.mxu0 0.0
    %290 = vmatpush1.msra.mxu0 0.0
    %291 = vmatprep.subr.mxu0 0.0
    %292 = vmatpush1.msra.mxu0 0.0
    %293 = vmatprep.subr.mxu0 0.0
    %294 = vmatpush1.msra.mxu0 0.0
    %295 = vmatprep.subr.mxu0 0.0
    %296 = vmatpush1.msra.mxu0 0.0
    %297 = vmatprep.subr.mxu0 0.0
    %298 = vmatpush1.msra.mxu0 0.0
    %299 = vmatprep.subr.mxu0 0.0
    %300 = vmatpush1.msra.mxu0 0.0
    %301 = vmatprep.subr.mxu0 0.0
    %302 = vmatpush1.msra.mxu0 0.0
    %303 = vmatprep.subr.mxu0 0.0
    %304 = vmatpush1.msra.mxu0 0.0
    %305 = vmatprep.subr.mxu0 0.0
    %306 = vmatpush1.msra.mxu0 0.0
    %307 = vmatprep.subr.mxu0 0.0
    %308 = vmatpush1.msra.mxu0 0.0
    %309 = vmatprep.subr.mxu0 0.0
    %310 = vmatpush1.msra.mxu0 0.0
    %311 = vmatprep.subr.mxu0 0.0
    %312 = vmatpush1.msra.mxu0 0.0
    %313 = vmatprep.subr.mxu0 0.0
    %314 = vmatpush1.msra.mxu0 0.0
    %315 = vmatprep.subr.mxu0 0.0
    %316 = vmatpush1.msra.mxu0 0.0
    %317 = vmatprep.subr.mxu0 0.0
    %318 = vmatpush1.msra.mxu0 0.0
    %319 = vmatprep.subr.mxu0 0.0
    %320 = vmatpush1.msra.mxu0 0.0
    %321 = vmatprep.subr.mxu0 0.0
    %322 = vmatpush1.msra.mxu0 0.0
    %323 = vmatprep.subr.mxu0 0.0
    %324 = vmatpush1.msra.mxu0 0.0
    %325 = vmatprep.subr.mxu0 0.0
    %326 = vmatpush1.msra.mxu0 0.0
    %327 = vmatprep.subr.mxu0 0.0
    %328 = vmatpush1.msra.mxu0 0.0
    %329 = vmatprep.subr.mxu0 0.0
    %330 = vmatpush1.msra.mxu0 0.0
    %331 = vmatprep.subr.mxu0 0.0
    %332 = vmatpush1.msra.mxu0 0.0
    %333 = vmatprep.subr.mxu0 0.0
    %334 = vmatpush1.msra.mxu0 0.0
    %335 = vmatprep.subr.mxu0 0.0
    %336 = vmatpush1.msra.mxu0 0.0
    %337 = vmatprep.mubr.f32.mxu0 0.0
    %338 = vmatmul.mubr.f32.gmra.mrb[0].mxu0 %v271
    %v339 = vpop.f32.mrb[0].mxu0
    %v340 = vadd.f32 0.0, %v339
    %v341 = vpop.f32.mrb[0].mxu0
    %342 = vdwg.mxu0
    %v343 = vadd.f32 %v268, %v340
    %v344 = vxor.u32 %v343, 2147483648
    %v345 = vmul.f32 %v344, 1.442695
    %v346 = vpow.pop %v345
    %v347 = vadd.f32 %v346, 1.0
    %v348 = vrcp.pop %v347
    %v349 = vmul.f32 1.0, %v348
    %v350 = vtanh.pop %v343
    %352 = vrot.lane.b32.xlu0 %v263, 32
    %v353 = vpop.permute.xlu0 %352
    %v355 = vmul.f32 %v349, %v353
    %357 = vrot.lane.b32.xlu0 %v350, 64
    %v358 = vpop.permute.xlu0 %357
    %v360 = vmul.f32 %v349, %v358
    %362 = vrot.lane.b32.xlu0 %v360, 32
    %v363 = vpop.permute.xlu0 %362
    %v365 = vadd.f32 %v355, %v363
    %v366 = vtanh.pop %v365
    %368 = vrot.lane.b32.xlu0 %v366, 64
    %v369 = vpop.permute.xlu0 %368
    %v371 = vmul.f32 %v349, %v369
    %373 = vrot.lane.b32.xlu0 %v371, 32
    %v374 = vpop.permute.xlu0 %373
    %377 = vrot.lane.b32.xlu0 %v265, 32
    %v378 = vpop.permute.xlu0 %377
    %v380 = vsel %vm269, %v374, %v378
    %vm381 = vcmask 523264
    %v383 = vsel %vm381, %v380, 0
    %385 = vmatprep.subr.mxu0 0.0
    %386 = vmatpush1.msra.mxu0 %v247
    %387 = vmatprep.subr.mxu0 0.0
    %388 = vmatpush1.msra.mxu0 %v248
    %389 = vmatprep.subr.mxu0 0.0
    %390 = vmatpush1.msra.mxu0 %v249
    %391 = vmatprep.subr.mxu0 0.0
    %392 = vmatpush1.msra.mxu0 %v250
    %393 = vmatprep.subr.mxu0 0.0
    %394 = vmatpush1.msra.mxu0 %v251
    %395 = vmatprep.subr.mxu0 0.0
    %396 = vmatpush1.msra.mxu0 %v252
    %397 = vmatprep.subr.mxu0 0.0
    %398 = vmatpush1.msra.mxu0 %v253
    %399 = vmatprep.subr.mxu0 0.0
    %400 = vmatpush1.msra.mxu0 %v254
    %401 = vmatprep.subr.mxu0 0.0
    %402 = vmatpush1.msra.mxu0 0.0
    %403 = vmatprep.subr.mxu0 0.0
    %404 = vmatpush1.msra.mxu0 0.0
    %405 = vmatprep.subr.mxu0 0.0
    %406 = vmatpush1.msra.mxu0 0.0
    %407 = vmatprep.subr.mxu0 0.0
    %408 = vmatpush1.msra.mxu0 0.0
    %409 = vmatprep.subr.mxu0 0.0
    %410 = vmatpush1.msra.mxu0 0.0
    %411 = vmatprep.subr.mxu0 0.0
    %412 = vmatpush1.msra.mxu0 0.0
    %413 = vmatprep.subr.mxu0 0.0
    %414 = vmatpush1.msra.mxu0 0.0
    %415 = vmatprep.subr.mxu0 0.0
    %416 = vmatpush1.msra.mxu0 0.0
    %417 = vmatprep.subr.mxu0 0.0
    %418 = vmatpush1.msra.mxu0 0.0
    %419 = vmatprep.subr.mxu0 0.0
    %420 = vmatpush1.msra.mxu0 0.0
    %421 = vmatprep.subr.mxu0 0.0
    %422 = vmatpush1.msra.mxu0 0.0
    %423 = vmatprep.subr.mxu0 0.0
    %424 = vmatpush1.msra.mxu0 0.0
    %425 = vmatprep.subr.mxu0 0.0
    %426 = vmatpush1.msra.mxu0 0.0
    %427 = vmatprep.subr.mxu0 0.0
    %428 = vmatpush1.msra.mxu0 0.0
    %429 = vmatprep.subr.mxu0 0.0
    %430 = vmatpush1.msra.mxu0 0.0
    %431 = vmatprep.subr.mxu0 0.0
    %432 = vmatpush1.msra.mxu0 0.0
    %433 = vmatprep.subr.mxu0 0.0
    %434 = vmatpush1.msra.mxu0 0.0
    %435 = vmatprep.subr.mxu0 0.0
    %436 = vmatpush1.msra.mxu0 0.0
    %437 = vmatprep.subr.mxu0 0.0
    %438 = vmatpush1.msra.mxu0 0.0
    %439 = vmatprep.subr.mxu0 0.0
    %440 = vmatpush1.msra.mxu0 0.0
    %441 = vmatprep.subr.mxu0 0.0
    %442 = vmatpush1.msra.mxu0 0.0
    %443 = vmatprep.subr.mxu0 0.0
    %444 = vmatpush1.msra.mxu0 0.0
    %445 = vmatprep.subr.mxu0 0.0
    %446 = vmatpush1.msra.mxu0 0.0
    %447 = vmatprep.subr.mxu0 0.0
    %448 = vmatpush1.msra.mxu0 0.0
    %449 = vmatprep.mubr.f32.mxu0 0.0
    %450 = vmatmul.mubr.f32.gmra.mrb[0].mxu0 %v383
    %v451 = vpop.f32.mrb[0].mxu0
    %v452 = vadd.f32 %v260, %v451
    %v453 = vpop.f32.mrb[0].mxu0
    %454 = vdwg.mxu0
    %v455 = vxor.u32 %v452, 2147483648
    %v456 = vmul.f32 %v455, 1.442695
    %v457 = vpow.pop %v456
    %v458 = vadd.f32 %v457, 1.0
    %v459 = vrcp.pop %v458
    %v460 = vmul.f32 1.0, %v459
    %v461 = vtanh.pop %v452
    %463 = vrot.lane.b32.xlu0 %v267, 32
    %v464 = vpop.permute.xlu0 %463
    %v466 = vmul.f32 %v460, %v464
    %468 = vrot.lane.b32.xlu0 %v461, 64
    %v469 = vpop.permute.xlu0 %468
    %v471 = vmul.f32 %v460, %v469
    %473 = vrot.lane.b32.xlu0 %v471, 32
    %v474 = vpop.permute.xlu0 %473
    %v476 = vadd.f32 %v466, %v474
    %v477 = vtanh.pop %v476
    %479 = vrot.lane.b32.xlu0 %v477, 64
    %v480 = vpop.permute.xlu0 %479
    %v482 = vmul.f32 %v460, %v480
    %v483 = vmax.f32 %v482, 0.0
    %485 = vrot.lane.b32.xlu0 %v483, 32
    %v486 = vpop.permute.xlu0 %485
    %vm488 = vcmask 254976
    %489 = vst.msk [vmem:[#allocation3] sm:$0x3] %vm488, %v486
    %v490 = vld [vmem:[#allocation2 + $0x2] sm:$0x3]
    %v491 = vsel %vm269, %v374, 0
    %493 = vmatprep.subr.mxu0 0.0
    %494 = vmatpush1.msra.mxu0 %v243
    %495 = vmatprep.subr.mxu0 0.0
    %496 = vmatpush1.msra.mxu0 %v244
    %497 = vmatprep.subr.mxu0 0.0
    %498 = vmatpush1.msra.mxu0 %v245
    %499 = vmatprep.subr.mxu0 0.0
    %500 = vmatpush1.msra.mxu0 %v246
    %501 = vmatprep.subr.mxu0 0.0
    %502 = vmatpush1.msra.mxu0 0.0
    %503 = vmatprep.subr.mxu0 0.0
    %504 = vmatpush1.msra.mxu0 0.0
    %505 = vmatprep.subr.mxu0 0.0
    %506 = vmatpush1.msra.mxu0 0.0
    %507 = vmatprep.subr.mxu0 0.0
    %508 = vmatpush1.msra.mxu0 0.0
    %509 = vmatprep.subr.mxu0 0.0
    %510 = vmatpush1.msra.mxu0 0.0
    %511 = vmatprep.subr.mxu0 0.0
    %512 = vmatpush1.msra.mxu0 0.0
    %513 = vmatprep.subr.mxu0 0.0
    %514 = vmatpush1.msra.mxu0 0.0
    %515 = vmatprep.subr.mxu0 0.0
    %516 = vmatpush1.msra.mxu0 0.0
    %517 = vmatprep.subr.mxu0 0.0
    %518 = vmatpush1.msra.mxu0 0.0
    %519 = vmatprep.subr.mxu0 0.0
    %520 = vmatpush1.msra.mxu0 0.0
    %521 = vmatprep.subr.mxu0 0.0
    %522 = vmatpush1.msra.mxu0 0.0
    %523 = vmatprep.subr.mxu0 0.0
    %524 = vmatpush1.msra.mxu0 0.0
    %525 = vmatprep.subr.mxu0 0.0
    %526 = vmatpush1.msra.mxu0 0.0
    %527 = vmatprep.subr.mxu0 0.0
    %528 = vmatpush1.msra.mxu0 0.0
    %529 = vmatprep.subr.mxu0 0.0
    %530 = vmatpush1.msra.mxu0 0.0
    %531 = vmatprep.subr.mxu0 0.0
    %532 = vmatpush1.msra.mxu0 0.0
    %533 = vmatprep.subr.mxu0 0.0
    %534 = vmatpush1.msra.mxu0 0.0
    %535 = vmatprep.subr.mxu0 0.0
    %536 = vmatpush1.msra.mxu0 0.0
    %537 = vmatprep.subr.mxu0 0.0
    %538 = vmatpush1.msra.mxu0 0.0
    %539 = vmatprep.subr.mxu0 0.0
    %540 = vmatpush1.msra.mxu0 0.0
    %541 = vmatprep.subr.mxu0 0.0
    %542 = vmatpush1.msra.mxu0 0.0
    %543 = vmatprep.subr.mxu0 0.0
    %544 = vmatpush1.msra.mxu0 0.0
    %545 = vmatprep.subr.mxu0 0.0
    %546 = vmatpush1.msra.mxu0 0.0
    %547 = vmatprep.subr.mxu0 0.0
    %548 = vmatpush1.msra.mxu0 0.0
    %549 = vmatprep.subr.mxu0 0.0
    %550 = vmatpush1.msra.mxu0 0.0
    %551 = vmatprep.subr.mxu0 0.0
    %552 = vmatpush1.msra.mxu0 0.0
    %553 = vmatprep.subr.mxu0 0.0
    %554 = vmatpush1.msra.mxu0 0.0
    %555 = vmatprep.subr.mxu0 0.0
    %556 = vmatpush1.msra.mxu0 0.0
    %557 = vmatprep.mubr.f32.mxu0 0.0
    %558 = vmatmul.mubr.f32.gmra.mrb[0].mxu0 %v491
    %v559 = vpop.f32.mrb[0].mxu0
    %v560 = vadd.f32 0.0, %v559
    %v561 = vpop.f32.mrb[0].mxu0
    %562 = vdwg.mxu0
    %v563 = vadd.f32 %v490, %v560
    %v564 = vxor.u32 %v563, 2147483648
    %v565 = vmul.f32 %v564, 1.442695
    %v566 = vpow.pop %v565
    %v567 = vadd.f32 %v566, 1.0
    %v568 = vrcp.pop %v567
    %v569 = vmul.f32 1.0, %v568
    %v570 = vtanh.pop %v563
    %v571 = vmul.f32 %v569, %v365
    %573 = vrot.lane.b32.xlu0 %v570, 64
    %v574 = vpop.permute.xlu0 %573
    %v576 = vmul.f32 %v569, %v574
    %578 = vrot.lane.b32.xlu0 %v576, 32
    %v579 = vpop.permute.xlu0 %578
    %v581 = vadd.f32 %v571, %v579
    %v582 = vtanh.pop %v581
    %584 = vrot.lane.b32.xlu0 %v582, 64
    %v585 = vpop.permute.xlu0 %584
    %v587 = vmul.f32 %v569, %v585
    %589 = vrot.lane.b32.xlu0 %v587, 32
    %v590 = vpop.permute.xlu0 %589
    %593 = vrot.lane.b32.xlu0 %v482, 64
    %v594 = vpop.permute.xlu0 %593
    %v596 = vsel %vm269, %v590, %v594
    %v598 = vsel %vm381, %v596, 0
    %600 = vmatprep.subr.mxu0 0.0
    %601 = vmatpush1.msra.mxu0 %v247
    %602 = vmatprep.subr.mxu0 0.0
    %603 = vmatpush1.msra.mxu0 %v248
    %604 = vmatprep.subr.mxu0 0.0
    %605 = vmatpush1.msra.mxu0 %v249
    %606 = vmatprep.subr.mxu0 0.0
    %607 = vmatpush1.msra.mxu0 %v250
    %608 = vmatprep.subr.mxu0 0.0
    %609 = vmatpush1.msra.mxu0 %v251
    %610 = vmatprep.subr.mxu0 0.0
    %611 = vmatpush1.msra.mxu0 %v252
    %612 = vmatprep.subr.mxu0 0.0
    %613 = vmatpush1.msra.mxu0 %v253
    %614 = vmatprep.subr.mxu0 0.0
    %615 = vmatpush1.msra.mxu0 %v254
    %616 = vmatprep.subr.mxu0 0.0
    %617 = vmatpush1.msra.mxu0 0.0
    %618 = vmatprep.subr.mxu0 0.0
    %619 = vmatpush1.msra.mxu0 0.0
    %620 = vmatprep.subr.mxu0 0.0
    %621 = vmatpush1.msra.mxu0 0.0
    %622 = vmatprep.subr.mxu0 0.0
    %623 = vmatpush1.msra.mxu0 0.0
    %624 = vmatprep.subr.mxu0 0.0
    %625 = vmatpush1.msra.mxu0 0.0
    %626 = vmatprep.subr.mxu0 0.0
    %627 = vmatpush1.msra.mxu0 0.0
    %628 = vmatprep.subr.mxu0 0.0
    %629 = vmatpush1.msra.mxu0 0.0
    %630 = vmatprep.subr.mxu0 0.0
    %631 = vmatpush1.msra.mxu0 0.0
    %632 = vmatprep.subr.mxu0 0.0
    %633 = vmatpush1.msra.mxu0 0.0
    %634 = vmatprep.subr.mxu0 0.0
    %635 = vmatpush1.msra.mxu0 0.0
    %636 = vmatprep.subr.mxu0 0.0
    %637 = vmatpush1.msra.mxu0 0.0
    %638 = vmatprep.subr.mxu0 0.0
    %639 = vmatpush1.msra.mxu0 0.0
    %640 = vmatprep.subr.mxu0 0.0
    %641 = vmatpush1.msra.mxu0 0.0
    %642 = vmatprep.subr.mxu0 0.0
    %643 = vmatpush1.msra.mxu0 0.0
    %644 = vmatprep.subr.mxu0 0.0
    %645 = vmatpush1.msra.mxu0 0.0
    %646 = vmatprep.subr.mxu0 0.0
    %647 = vmatpush1.msra.mxu0 0.0
    %648 = vmatprep.subr.mxu0 0.0
    %649 = vmatpush1.msra.mxu0 0.0
    %650 = vmatprep.subr.mxu0 0.0
    %651 = vmatpush1.msra.mxu0 0.0
    %652 = vmatprep.subr.mxu0 0.0
    %653 = vmatpush1.msra.mxu0 0.0
    %654 = vmatprep.subr.mxu0 0.0
    %655 = vmatpush1.msra.mxu0 0.0
    %656 = vmatprep.subr.mxu0 0.0
    %657 = vmatpush1.msra.mxu0 0.0
    %658 = vmatprep.subr.mxu0 0.0
    %659 = vmatpush1.msra.mxu0 0.0
    %660 = vmatprep.subr.mxu0 0.0
    %661 = vmatpush1.msra.mxu0 0.0
    %662 = vmatprep.subr.mxu0 0.0
    %663 = vmatpush1.msra.mxu0 0.0
    %664 = vmatprep.mubr.f32.mxu0 0.0
    %665 = vmatmul.mubr.f32.gmra.mrb[0].mxu0 %v598
    %v666 = vpop.f32.mrb[0].mxu0
    %v667 = vadd.f32 %v260, %v666
    %v668 = vpop.f32.mrb[0].mxu0
    %669 = vdwg.mxu0
    %v670 = vxor.u32 %v667, 2147483648
    %v671 = vmul.f32 %v670, 1.442695
    %v672 = vpow.pop %v671
    %v673 = vadd.f32 %v672, 1.0
    %v674 = vrcp.pop %v673
    %v675 = vmul.f32 1.0, %v674
    %v676 = vtanh.pop %v667
    %v677 = vmul.f32 %v675, %v476
    %679 = vrot.lane.b32.xlu0 %v676, 64
    %v680 = vpop.permute.xlu0 %679
    %v682 = vmul.f32 %v675, %v680
    %684 = vrot.lane.b32.xlu0 %v682, 32
    %v685 = vpop.permute.xlu0 %684
    %v687 = vadd.f32 %v677, %v685
    %v688 = vtanh.pop %v687
    %690 = vrot.lane.b32.xlu0 %v688, 64
    %v691 = vpop.permute.xlu0 %690
    %v693 = vmul.f32 %v675, %v691
    %v694 = vmax.f32 %v693, 0.0
    %696 = vrot.lane.b32.xlu0 %v694, 32
    %v697 = vpop.permute.xlu0 %696
    %699 = vst.msk [vmem:[#allocation3 + $0x2] sm:$0x3] %vm488, %v697
    %v700 = vld [vmem:[#allocation2 + $0x4] sm:$0x3]
    %v701 = vsel %vm269, %v590, 0
    %703 = vmatprep.subr.mxu0 0.0
    %704 = vmatpush1.msra.mxu0 %v243
    %705 = vmatprep.subr.mxu0 0.0
    %706 = vmatpush1.msra.mxu0 %v244
    %707 = vmatprep.subr.mxu0 0.0
    %708 = vmatpush1.msra.mxu0 %v245
    %709 = vmatprep.subr.mxu0 0.0
    %710 = vmatpush1.msra.mxu0 %v246
    %711 = vmatprep.subr.mxu0 0.0
    %712 = vmatpush1.msra.mxu0 0.0
    %713 = vmatprep.subr.mxu0 0.0
    %714 = vmatpush1.msra.mxu0 0.0
    %715 = vmatprep.subr.mxu0 0.0
    %716 = vmatpush1.msra.mxu0 0.0
    %717 = vmatprep.subr.mxu0 0.0
    %718 = vmatpush1.msra.mxu0 0.0
    %719 = vmatprep.subr.mxu0 0.0
    %720 = vmatpush1.msra.mxu0 0.0
    %721 = vmatprep.subr.mxu0 0.0
    %722 = vmatpush1.msra.mxu0 0.0
    %723 = vmatprep.subr.mxu0 0.0
    %724 = vmatpush1.msra.mxu0 0.0
    %725 = vmatprep.subr.mxu0 0.0
    %726 = vmatpush1.msra.mxu0 0.0
    %727 = vmatprep.subr.mxu0 0.0
    %728 = vmatpush1.msra.mxu0 0.0
    %729 = vmatprep.subr.mxu0 0.0
    %730 = vmatpush1.msra.mxu0 0.0
    %731 = vmatprep.subr.mxu0 0.0
    %732 = vmatpush1.msra.mxu0 0.0
    %733 = vmatprep.subr.mxu0 0.0
    %734 = vmatpush1.msra.mxu0 0.0
    %735 = vmatprep.subr.mxu0 0.0
    %736 = vmatpush1.msra.mxu0 0.0
    %737 = vmatprep.subr.mxu0 0.0
    %738 = vmatpush1.msra.mxu0 0.0
    %739 = vmatprep.subr.mxu0 0.0
    %740 = vmatpush1.msra.mxu0 0.0
    %741 = vmatprep.subr.mxu0 0.0
    %742 = vmatpush1.msra.mxu0 0.0
    %743 = vmatprep.subr.mxu0 0.0
    %744 = vmatpush1.msra.mxu0 0.0
    %745 = vmatprep.subr.mxu0 0.0
    %746 = vmatpush1.msra.mxu0 0.0
    %747 = vmatprep.subr.mxu0 0.0
    %748 = vmatpush1.msra.mxu0 0.0
    %749 = vmatprep.subr.mxu0 0.0
    %750 = vmatpush1.msra.mxu0 0.0
    %751 = vmatprep.subr.mxu0 0.0
    %752 = vmatpush1.msra.mxu0 0.0
    %753 = vmatprep.subr.mxu0 0.0
    %754 = vmatpush1.msra.mxu0 0.0
    %755 = vmatprep.subr.mxu0 0.0
    %756 = vmatpush1.msra.mxu0 0.0
    %757 = vmatprep.subr.mxu0 0.0
    %758 = vmatpush1.msra.mxu0 0.0
    %759 = vmatprep.subr.mxu0 0.0
    %760 = vmatpush1.msra.mxu0 0.0
    %761 = vmatprep.subr.mxu0 0.0
    %762 = vmatpush1.msra.mxu0 0.0
    %763 = vmatprep.subr.mxu0 0.0
    %764 = vmatpush1.msra.mxu0 0.0
    %765 = vmatprep.subr.mxu0 0.0
    %766 = vmatpush1.msra.mxu0 0.0
    %767 = vmatprep.mubr.f32.mxu0 0.0
    %768 = vmatmul.mubr.f32.gmra.mrb[0].mxu0 %v701
    %v769 = vpop.f32.mrb[0].mxu0
    %v770 = vadd.f32 0.0, %v769
    %v771 = vpop.f32.mrb[0].mxu0
    %772 = vdwg.mxu0
    %v773 = vadd.f32 %v700, %v770
    %v774 = vxor.u32 %v773, 2147483648
    %v775 = vmul.f32 %v774, 1.442695
    %v776 = vpow.pop %v775
    %v777 = vadd.f32 %v776, 1.0
    %v778 = vrcp.pop %v777
    %v779 = vmul.f32 1.0, %v778
    %v780 = vtanh.pop %v773
    %v781 = vmul.f32 %v779, %v581
    %783 = vrot.lane.b32.xlu0 %v780, 64
    %v784 = vpop.permute.xlu0 %783
    %v786 = vmul.f32 %v779, %v784
    %788 = vrot.lane.b32.xlu0 %v786, 32
    %v789 = vpop.permute.xlu0 %788
    %v791 = vadd.f32 %v781, %v789
    %v792 = vtanh.pop %v791
    %794 = vrot.lane.b32.xlu0 %v792, 64
    %v795 = vpop.permute.xlu0 %794
    %v797 = vmul.f32 %v779, %v795
    %799 = vrot.lane.b32.xlu0 %v797, 32
    %v800 = vpop.permute.xlu0 %799
    %803 = vrot.lane.b32.xlu0 %v693, 64
    %v804 = vpop.permute.xlu0 %803
    %v806 = vsel %vm269, %v800, %v804
    %v808 = vsel %vm381, %v806, 0
    %810 = vmatprep.subr.mxu0 0.0
    %811 = vmatpush1.msra.mxu0 %v247
    %812 = vmatprep.subr.mxu0 0.0
    %813 = vmatpush1.msra.mxu0 %v248
    %814 = vmatprep.subr.mxu0 0.0
    %815 = vmatpush1.msra.mxu0 %v249
    %816 = vmatprep.subr.mxu0 0.0
    %817 = vmatpush1.msra.mxu0 %v250
    %818 = vmatprep.subr.mxu0 0.0
    %819 = vmatpush1.msra.mxu0 %v251
    %820 = vmatprep.subr.mxu0 0.0
    %821 = vmatpush1.msra.mxu0 %v252
    %822 = vmatprep.subr.mxu0 0.0
    %823 = vmatpush1.msra.mxu0 %v253
    %824 = vmatprep.subr.mxu0 0.0
    %825 = vmatpush1.msra.mxu0 %v254
    %826 = vmatprep.subr.mxu0 0.0
    %827 = vmatpush1.msra.mxu0 0.0
    %828 = vmatprep.subr.mxu0 0.0
    %829 = vmatpush1.msra.mxu0 0.0
    %830 = vmatprep.subr.mxu0 0.0
    %831 = vmatpush1.msra.mxu0 0.0
    %832 = vmatprep.subr.mxu0 0.0
    %833 = vmatpush1.msra.mxu0 0.0
    %834 = vmatprep.subr.mxu0 0.0
    %835 = vmatpush1.msra.mxu0 0.0
    %836 = vmatprep.subr.mxu0 0.0
    %837 = vmatpush1.msra.mxu0 0.0
    %838 = vmatprep.subr.mxu0 0.0
    %839 = vmatpush1.msra.mxu0 0.0
    %840 = vmatprep.subr.mxu0 0.0
    %841 = vmatpush1.msra.mxu0 0.0
    %842 = vmatprep.subr.mxu0 0.0
    %843 = vmatpush1.msra.mxu0 0.0
    %844 = vmatprep.subr.mxu0 0.0
    %845 = vmatpush1.msra.mxu0 0.0
    %846 = vmatprep.subr.mxu0 0.0
    %847 = vmatpush1.msra.mxu0 0.0
    %848 = vmatprep.subr.mxu0 0.0
    %849 = vmatpush1.msra.mxu0 0.0
    %850 = vmatprep.subr.mxu0 0.0
    %851 = vmatpush1.msra.mxu0 0.0
    %852 = vmatprep.subr.mxu0 0.0
    %853 = vmatpush1.msra.mxu0 0.0
    %854 = vmatprep.subr.mxu0 0.0
    %855 = vmatpush1.msra.mxu0 0.0
    %856 = vmatprep.subr.mxu0 0.0
    %857 = vmatpush1.msra.mxu0 0.0
    %858 = vmatprep.subr.mxu0 0.0
    %859 = vmatpush1.msra.mxu0 0.0
    %860 = vmatprep.subr.mxu0 0.0
    %861 = vmatpush1.msra.mxu0 0.0
    %862 = vmatprep.subr.mxu0 0.0
    %863 = vmatpush1.msra.mxu0 0.0
    %864 = vmatprep.subr.mxu0 0.0
    %865 = vmatpush1.msra.mxu0 0.0
    %866 = vmatprep.subr.mxu0 0.0
    %867 = vmatpush1.msra.mxu0 0.0
    %868 = vmatprep.subr.mxu0 0.0
    %869 = vmatpush1.msra.mxu0 0.0
    %870 = vmatprep.subr.mxu0 0.0
    %871 = vmatpush1.msra.mxu0 0.0
    %872 = vmatprep.subr.mxu0 0.0
    %873 = vmatpush1.msra.mxu0 0.0
    %874 = vmatprep.mubr.f32.mxu0 0.0
    %875 = vmatmul.mubr.f32.gmra.mrb[0].mxu0 %v808
    %v876 = vpop.f32.mrb[0].mxu0
    %v877 = vadd.f32 %v260, %v876
    %v878 = vpop.f32.mrb[0].mxu0
    %879 = vdwg.mxu0
    %v880 = vxor.u32 %v877, 2147483648
    %v881 = vmul.f32 %v880, 1.442695
    %v882 = vpow.pop %v881
    %v883 = vadd.f32 %v882, 1.0
    %v884 = vrcp.pop %v883
    %v885 = vmul.f32 1.0, %v884
    %v886 = vtanh.pop %v877
    %v887 = vmul.f32 %v885, %v687
    %889 = vrot.lane.b32.xlu0 %v886, 64
    %v890 = vpop.permute.xlu0 %889
    %v892 = vmul.f32 %v885, %v890
    %894 = vrot.lane.b32.xlu0 %v892, 32
    %v895 = vpop.permute.xlu0 %894
    %v897 = vadd.f32 %v887, %v895
    %v898 = vtanh.pop %v897
    %900 = vrot.lane.b32.xlu0 %v898, 64
    %v901 = vpop.permute.xlu0 %900
    %v903 = vmul.f32 %v885, %v901
    %v904 = vmax.f32 %v903, 0.0
    %906 = vrot.lane.b32.xlu0 %v904, 32
    %v907 = vpop.permute.xlu0 %906
    %909 = vst.msk [vmem:[#allocation3 + $0x4] sm:$0x3] %vm488, %v907
    %v910 = vld [vmem:[#allocation2 + $0x6] sm:$0x3]
    %v911 = vsel %vm269, %v800, 0
    %913 = vmatprep.subr.mxu0 0.0
    %914 = vmatpush1.msra.mxu0 %v243
    %915 = vmatprep.subr.mxu0 0.0
    %916 = vmatpush1.msra.mxu0 %v244
    %917 = vmatprep.subr.mxu0 0.0
    %918 = vmatpush1.msra.mxu0 %v245
    %919 = vmatprep.subr.mxu0 0.0
    %920 = vmatpush1.msra.mxu0 %v246
    %921 = vmatprep.subr.mxu0 0.0
    %922 = vmatpush1.msra.mxu0 0.0
    %923 = vmatprep.subr.mxu0 0.0
    %924 = vmatpush1.msra.mxu0 0.0
    %925 = vmatprep.subr.mxu0 0.0
    %926 = vmatpush1.msra.mxu0 0.0
    %927 = vmatprep.subr.mxu0 0.0
    %928 = vmatpush1.msra.mxu0 0.0
    %929 = vmatprep.subr.mxu0 0.0
    %930 = vmatpush1.msra.mxu0 0.0
    %931 = vmatprep.subr.mxu0 0.0
    %932 = vmatpush1.msra.mxu0 0.0
    %933 = vmatprep.subr.mxu0 0.0
    %934 = vmatpush1.msra.mxu0 0.0
    %935 = vmatprep.subr.mxu0 0.0
    %936 = vmatpush1.msra.mxu0 0.0
    %937 = vmatprep.subr.mxu0 0.0
    %938 = vmatpush1.msra.mxu0 0.0
    %939 = vmatprep.subr.mxu0 0.0
    %940 = vmatpush1.msra.mxu0 0.0
    %941 = vmatprep.subr.mxu0 0.0
    %942 = vmatpush1.msra.mxu0 0.0
    %943 = vmatprep.subr.mxu0 0.0
    %944 = vmatpush1.msra.mxu0 0.0
    %945 = vmatprep.subr.mxu0 0.0
    %946 = vmatpush1.msra.mxu0 0.0
    %947 = vmatprep.subr.mxu0 0.0
    %948 = vmatpush1.msra.mxu0 0.0
    %949 = vmatprep.subr.mxu0 0.0
    %950 = vmatpush1.msra.mxu0 0.0
    %951 = vmatprep.subr.mxu0 0.0
    %952 = vmatpush1.msra.mxu0 0.0
    %953 = vmatprep.subr.mxu0 0.0
    %954 = vmatpush1.msra.mxu0 0.0
    %955 = vmatprep.subr.mxu0 0.0
    %956 = vmatpush1.msra.mxu0 0.0
    %957 = vmatprep.subr.mxu0 0.0
    %958 = vmatpush1.msra.mxu0 0.0
    %959 = vmatprep.subr.mxu0 0.0
    %960 = vmatpush1.msra.mxu0 0.0
    %961 = vmatprep.subr.mxu0 0.0
    %962 = vmatpush1.msra.mxu0 0.0
    %963 = vmatprep.subr.mxu0 0.0
    %964 = vmatpush1.msra.mxu0 0.0
    %965 = vmatprep.subr.mxu0 0.0
    %966 = vmatpush1.msra.mxu0 0.0
    %967 = vmatprep.subr.mxu0 0.0
    %968 = vmatpush1.msra.mxu0 0.0
    %969 = vmatprep.subr.mxu0 0.0
    %970 = vmatpush1.msra.mxu0 0.0
    %971 = vmatprep.subr.mxu0 0.0
    %972 = vmatpush1.msra.mxu0 0.0
    %973 = vmatprep.subr.mxu0 0.0
    %974 = vmatpush1.msra.mxu0 0.0
    %975 = vmatprep.subr.mxu0 0.0
    %976 = vmatpush1.msra.mxu0 0.0
    %977 = vmatprep.mubr.f32.mxu0 0.0
    %978 = vmatmul.mubr.f32.gmra.mrb[0].mxu0 %v911
    %v979 = vpop.f32.mrb[0].mxu0
    %v980 = vadd.f32 0.0, %v979
    %v981 = vpop.f32.mrb[0].mxu0
    %982 = vdwg.mxu0
    %v983 = vadd.f32 %v910, %v980
    %v984 = vxor.u32 %v983, 2147483648
    %v985 = vmul.f32 %v984, 1.442695
    %v986 = vpow.pop %v985
    %v987 = vadd.f32 %v986, 1.0
    %v988 = vrcp.pop %v987
    %v989 = vmul.f32 1.0, %v988
    %v990 = vtanh.pop %v983
    %v991 = vmul.f32 %v989, %v791
    %993 = vrot.lane.b32.xlu0 %v990, 64
    %v994 = vpop.permute.xlu0 %993
    %v996 = vmul.f32 %v989, %v994
    %998 = vrot.lane.b32.xlu0 %v996, 32
    %v999 = vpop.permute.xlu0 %998
    %v1001 = vadd.f32 %v991, %v999
    %v1002 = vtanh.pop %v1001
    %1004 = vrot.lane.b32.xlu0 %v1002, 64
    %v1005 = vpop.permute.xlu0 %1004
    %v1007 = vmul.f32 %v989, %v1005
    %1009 = vrot.lane.b32.xlu0 %v1007, 32
    %v1010 = vpop.permute.xlu0 %1009
    %1013 = vrot.lane.b32.xlu0 %v903, 64
    %v1014 = vpop.permute.xlu0 %1013
    %v1016 = vsel %vm269, %v1010, %v1014
    %v1018 = vsel %vm381, %v1016, 0
    %1020 = vmatprep.subr.mxu0 0.0
    %1021 = vmatpush1.msra.mxu0 %v247
    %1022 = vmatprep.subr.mxu0 0.0
    %1023 = vmatpush1.msra.mxu0 %v248
    %1024 = vmatprep.subr.mxu0 0.0
    %1025 = vmatpush1.msra.mxu0 %v249
    %1026 = vmatprep.subr.mxu0 0.0
    %1027 = vmatpush1.msra.mxu0 %v250
    %1028 = vmatprep.subr.mxu0 0.0
    %1029 = vmatpush1.msra.mxu0 %v251
    %1030 = vmatprep.subr.mxu0 0.0
    %1031 = vmatpush1.msra.mxu0 %v252
    %1032 = vmatprep.subr.mxu0 0.0
    %1033 = vmatpush1.msra.mxu0 %v253
    %1034 = vmatprep.subr.mxu0 0.0
    %1035 = vmatpush1.msra.mxu0 %v254
    %1036 = vmatprep.subr.mxu0 0.0
    %1037 = vmatpush1.msra.mxu0 0.0
    %1038 = vmatprep.subr.mxu0 0.0
    %1039 = vmatpush1.msra.mxu0 0.0
    %1040 = vmatprep.subr.mxu0 0.0
    %1041 = vmatpush1.msra.mxu0 0.0
    %1042 = vmatprep.subr.mxu0 0.0
    %1043 = vmatpush1.msra.mxu0 0.0
    %1044 = vmatprep.subr.mxu0 0.0
    %1045 = vmatpush1.msra.mxu0 0.0
    %1046 = vmatprep.subr.mxu0 0.0
    %1047 = vmatpush1.msra.mxu0 0.0
    %1048 = vmatprep.subr.mxu0 0.0
    %1049 = vmatpush1.msra.mxu0 0.0
    %1050 = vmatprep.subr.mxu0 0.0
    %1051 = vmatpush1.msra.mxu0 0.0
    %1052 = vmatprep.subr.mxu0 0.0
    %1053 = vmatpush1.msra.mxu0 0.0
    %1054 = vmatprep.subr.mxu0 0.0
    %1055 = vmatpush1.msra.mxu0 0.0
    %1056 = vmatprep.subr.mxu0 0.0
    %1057 = vmatpush1.msra.mxu0 0.0
    %1058 = vmatprep.subr.mxu0 0.0
    %1059 = vmatpush1.msra.mxu0 0.0
    %1060 = vmatprep.subr.mxu0 0.0
    %1061 = vmatpush1.msra.mxu0 0.0
    %1062 = vmatprep.subr.mxu0 0.0
    %1063 = vmatpush1.msra.mxu0 0.0
    %1064 = vmatprep.subr.mxu0 0.0
    %1065 = vmatpush1.msra.mxu0 0.0
    %1066 = vmatprep.subr.mxu0 0.0
    %1067 = vmatpush1.msra.mxu0 0.0
    %1068 = vmatprep.subr.mxu0 0.0
    %1069 = vmatpush1.msra.mxu0 0.0
    %1070 = vmatprep.subr.mxu0 0.0
    %1071 = vmatpush1.msra.mxu0 0.0
    %1072 = vmatprep.subr.mxu0 0.0
    %1073 = vmatpush1.msra.mxu0 0.0
    %1074 = vmatprep.subr.mxu0 0.0
    %1075 = vmatpush1.msra.mxu0 0.0
    %1076 = vmatprep.subr.mxu0 0.0
    %1077 = vmatpush1.msra.mxu0 0.0
    %1078 = vmatprep.subr.mxu0 0.0
    %1079 = vmatpush1.msra.mxu0 0.0
    %1080 = vmatprep.subr.mxu0 0.0
    %1081 = vmatpush1.msra.mxu0 0.0
    %1082 = vmatprep.subr.mxu0 0.0
    %1083 = vmatpush1.msra.mxu0 0.0
    %1084 = vmatprep.mubr.f32.mxu0 0.0
    %1085 = vmatmul.mubr.f32.gmra.mrb[0].mxu0 %v1018
    %v1086 = vpop.f32.mrb[0].mxu0
    %v1087 = vadd.f32 %v260, %v1086
    %v1088 = vpop.f32.mrb[0].mxu0
    %1089 = vdwg.mxu0
    %v1090 = vxor.u32 %v1087, 2147483648
    %v1091 = vmul.f32 %v1090, 1.442695
    %v1092 = vpow.pop %v1091
    %v1093 = vadd.f32 %v1092, 1.0
    %v1094 = vrcp.pop %v1093
    %v1095 = vmul.f32 1.0, %v1094
    %v1096 = vtanh.pop %v1087
    %v1097 = vmul.f32 %v1095, %v897
    %1099 = vrot.lane.b32.xlu0 %v1096, 64
    %v1100 = vpop.permute.xlu0 %1099
    %v1102 = vmul.f32 %v1095, %v1100
    %1104 = vrot.lane.b32.xlu0 %v1102, 32
    %v1105 = vpop.permute.xlu0 %1104
    %v1107 = vadd.f32 %v1097, %v1105
    %v1108 = vtanh.pop %v1107
    %1110 = vrot.lane.b32.xlu0 %v1108, 64
    %v1111 = vpop.permute.xlu0 %1110
    %v1113 = vmul.f32 %v1095, %v1111
    %v1114 = vmax.f32 %v1113, 0.0
    %1116 = vrot.lane.b32.xlu0 %v1114, 32
    %v1117 = vpop.permute.xlu0 %1116
    %1119 = vst.msk [vmem:[#allocation3 + $0x6] sm:$0x3] %vm488, %v1117
    %v1120 = vld [vmem:[#allocation2 + $0x8] sm:$0x3]
    %v1121 = vsel %vm269, %v1010, 0
    %1123 = vmatprep.subr.mxu0 0.0
    %1124 = vmatpush1.msra.mxu0 %v243
    %1125 = vmatprep.subr.mxu0 0.0
    %1126 = vmatpush1.msra.mxu0 %v244
    %1127 = vmatprep.subr.mxu0 0.0
    %1128 = vmatpush1.msra.mxu0 %v245
    %1129 = vmatprep.subr.mxu0 0.0
    %1130 = vmatpush1.msra.mxu0 %v246
    %1131 = vmatprep.subr.mxu0 0.0
    %1132 = vmatpush1.msra.mxu0 0.0
    %1133 = vmatprep.subr.mxu0 0.0
    %1134 = vmatpush1.msra.mxu0 0.0
    %1135 = vmatprep.subr.mxu0 0.0
    %1136 = vmatpush1.msra.mxu0 0.0
    %1137 = vmatprep.subr.mxu0 0.0
    %1138 = vmatpush1.msra.mxu0 0.0
    %1139 = vmatprep.subr.mxu0 0.0
    %1140 = vmatpush1.msra.mxu0 0.0
    %1141 = vmatprep.subr.mxu0 0.0
    %1142 = vmatpush1.msra.mxu0 0.0
    %1143 = vmatprep.subr.mxu0 0.0
    %1144 = vmatpush1.msra.mxu0 0.0
    %1145 = vmatprep.subr.mxu0 0.0
    %1146 = vmatpush1.msra.mxu0 0.0
    %1147 = vmatprep.subr.mxu0 0.0
    %1148 = vmatpush1.msra.mxu0 0.0
    %1149 = vmatprep.subr.mxu0 0.0
    %1150 = vmatpush1.msra.mxu0 0.0
    %1151 = vmatprep.subr.mxu0 0.0
    %1152 = vmatpush1.msra.mxu0 0.0
    %1153 = vmatprep.subr.mxu0 0.0
    %1154 = vmatpush1.msra.mxu0 0.0
    %1155 = vmatprep.subr.mxu0 0.0
    %1156 = vmatpush1.msra.mxu0 0.0
    %1157 = vmatprep.subr.mxu0 0.0
    %1158 = vmatpush1.msra.mxu0 0.0
    %1159 = vmatprep.subr.mxu0 0.0
    %1160 = vmatpush1.msra.mxu0 0.0
    %1161 = vmatprep.subr.mxu0 0.0
    %1162 = vmatpush1.msra.mxu0 0.0
    %1163 = vmatprep.subr.mxu0 0.0
    %1164 = vmatpush1.msra.mxu0 0.0
    %1165 = vmatprep.subr.mxu0 0.0
    %1166 = vmatpush1.msra.mxu0 0.0
    %1167 = vmatprep.subr.mxu0 0.0
    %1168 = vmatpush1.msra.mxu0 0.0
    %1169 = vmatprep.subr.mxu0 0.0
    %1170 = vmatpush1.msra.mxu0 0.0
    %1171 = vmatprep.subr.mxu0 0.0
    %1172 = vmatpush1.msra.mxu0 0.0
    %1173 = vmatprep.subr.mxu0 0.0
    %1174 = vmatpush1.msra.mxu0 0.0
    %1175 = vmatprep.subr.mxu0 0.0
    %1176 = vmatpush1.msra.mxu0 0.0
    %1177 = vmatprep.subr.mxu0 0.0
    %1178 = vmatpush1.msra.mxu0 0.0
    %1179 = vmatprep.subr.mxu0 0.0
    %1180 = vmatpush1.msra.mxu0 0.0
    %1181 = vmatprep.subr.mxu0 0.0
    %1182 = vmatpush1.msra.mxu0 0.0
    %1183 = vmatprep.subr.mxu0 0.0
    %1184 = vmatpush1.msra.mxu0 0.0
    %1185 = vmatprep.subr.mxu0 0.0
    %1186 = vmatpush1.msra.mxu0 0.0
    %1187 = vmatprep.mubr.f32.mxu0 0.0
    %1188 = vmatmul.mubr.f32.gmra.mrb[0].mxu0 %v1121
    %v1189 = vpop.f32.mrb[0].mxu0
    %v1190 = vadd.f32 0.0, %v1189
    %v1191 = vpop.f32.mrb[0].mxu0
    %1192 = vdwg.mxu0
    %v1193 = vadd.f32 %v1120, %v1190
    %v1194 = vxor.u32 %v1193, 2147483648
    %v1195 = vmul.f32 %v1194, 1.442695
    %v1196 = vpow.pop %v1195
    %v1197 = vadd.f32 %v1196, 1.0
    %v1198 = vrcp.pop %v1197
    %v1199 = vmul.f32 1.0, %v1198
    %v1200 = vtanh.pop %v1193
    %v1201 = vmul.f32 %v1199, %v1001
    %1203 = vrot.lane.b32.xlu0 %v1200, 64
    %v1204 = vpop.permute.xlu0 %1203
    %v1206 = vmul.f32 %v1199, %v1204
    %1208 = vrot.lane.b32.xlu0 %v1206, 32
    %v1209 = vpop.permute.xlu0 %1208
    %v1211 = vadd.f32 %v1201, %v1209
    %v1212 = vtanh.pop %v1211
    %1214 = vrot.lane.b32.xlu0 %v1212, 64
    %v1215 = vpop.permute.xlu0 %1214
    %v1217 = vmul.f32 %v1199, %v1215
    %1219 = vrot.lane.b32.xlu0 %v1217, 32
    %v1220 = vpop.permute.xlu0 %1219
    %1223 = vrot.lane.b32.xlu0 %v1113, 64
    %v1224 = vpop.permute.xlu0 %1223
    %v1226 = vsel %vm269, %v1220, %v1224
    %v1228 = vsel %vm381, %v1226, 0
    %1230 = vmatprep.subr.mxu0 0.0
    %1231 = vmatpush1.msra.mxu0 %v247
    %1232 = vmatprep.subr.mxu0 0.0
    %1233 = vmatpush1.msra.mxu0 %v248
    %1234 = vmatprep.subr.mxu0 0.0
    %1235 = vmatpush1.msra.mxu0 %v249
    %1236 = vmatprep.subr.mxu0 0.0
    %1237 = vmatpush1.msra.mxu0 %v250
    %1238 = vmatprep.subr.mxu0 0.0
    %1239 = vmatpush1.msra.mxu0 %v251
    %1240 = vmatprep.subr.mxu0 0.0
    %1241 = vmatpush1.msra.mxu0 %v252
    %1242 = vmatprep.subr.mxu0 0.0
    %1243 = vmatpush1.msra.mxu0 %v253
    %1244 = vmatprep.subr.mxu0 0.0
    %1245 = vmatpush1.msra.mxu0 %v254
    %1246 = vmatprep.subr.mxu0 0.0
    %1247 = vmatpush1.msra.mxu0 0.0
    %1248 = vmatprep.subr.mxu0 0.0
    %1249 = vmatpush1.msra.mxu0 0.0
    %1250 = vmatprep.subr.mxu0 0.0
    %1251 = vmatpush1.msra.mxu0 0.0
    %1252 = vmatprep.subr.mxu0 0.0
    %1253 = vmatpush1.msra.mxu0 0.0
    %1254 = vmatprep.subr.mxu0 0.0
    %1255 = vmatpush1.msra.mxu0 0.0
    %1256 = vmatprep.subr.mxu0 0.0
    %1257 = vmatpush1.msra.mxu0 0.0
    %1258 = vmatprep.subr.mxu0 0.0
    %1259 = vmatpush1.msra.mxu0 0.0
    %1260 = vmatprep.subr.mxu0 0.0
    %1261 = vmatpush1.msra.mxu0 0.0
    %1262 = vmatprep.subr.mxu0 0.0
    %1263 = vmatpush1.msra.mxu0 0.0
    %1264 = vmatprep.subr.mxu0 0.0
    %1265 = vmatpush1.msra.mxu0 0.0
    %1266 = vmatprep.subr.mxu0 0.0
    %1267 = vmatpush1.msra.mxu0 0.0
    %1268 = vmatprep.subr.mxu0 0.0
    %1269 = vmatpush1.msra.mxu0 0.0
    %1270 = vmatprep.subr.mxu0 0.0
    %1271 = vmatpush1.msra.mxu0 0.0
    %1272 = vmatprep.subr.mxu0 0.0
    %1273 = vmatpush1.msra.mxu0 0.0
    %1274 = vmatprep.subr.mxu0 0.0
    %1275 = vmatpush1.msra.mxu0 0.0
    %1276 = vmatprep.subr.mxu0 0.0
    %1277 = vmatpush1.msra.mxu0 0.0
    %1278 = vmatprep.subr.mxu0 0.0
    %1279 = vmatpush1.msra.mxu0 0.0
    %1280 = vmatprep.subr.mxu0 0.0
    %1281 = vmatpush1.msra.mxu0 0.0
    %1282 = vmatprep.subr.mxu0 0.0
    %1283 = vmatpush1.msra.mxu0 0.0
    %1284 = vmatprep.subr.mxu0 0.0
    %1285 = vmatpush1.msra.mxu0 0.0
    %1286 = vmatprep.subr.mxu0 0.0
    %1287 = vmatpush1.msra.mxu0 0.0
    %1288 = vmatprep.subr.mxu0 0.0
    %1289 = vmatpush1.msra.mxu0 0.0
    %1290 = vmatprep.subr.mxu0 0.0
    %1291 = vmatpush1.msra.mxu0 0.0
    %1292 = vmatprep.subr.mxu0 0.0
    %1293 = vmatpush1.msra.mxu0 0.0
    %1294 = vmatprep.mubr.f32.mxu0 0.0
    %1295 = vmatmul.mubr.f32.gmra.mrb[0].mxu0 %v1228
    %v1296 = vpop.f32.mrb[0].mxu0
    %v1297 = vadd.f32 %v260, %v1296
    %v1298 = vpop.f32.mrb[0].mxu0
    %1299 = vdwg.mxu0
    %v1300 = vxor.u32 %v1297, 2147483648
    %v1301 = vmul.f32 %v1300, 1.442695
    %v1302 = vpow.pop %v1301
    %v1303 = vadd.f32 %v1302, 1.0
    %v1304 = vrcp.pop %v1303
    %v1305 = vmul.f32 1.0, %v1304
    %v1306 = vtanh.pop %v1297
    %v1307 = vmul.f32 %v1305, %v1107
    %1309 = vrot.lane.b32.xlu0 %v1306, 64
    %v1310 = vpop.permute.xlu0 %1309
    %v1312 = vmul.f32 %v1305, %v1310
    %1314 = vrot.lane.b32.xlu0 %v1312, 32
    %v1315 = vpop.permute.xlu0 %1314
    %v1317 = vadd.f32 %v1307, %v1315
    %v1318 = vtanh.pop %v1317
    %1320 = vrot.lane.b32.xlu0 %v1318, 64
    %v1321 = vpop.permute.xlu0 %1320
    %v1323 = vmul.f32 %v1305, %v1321
    %v1324 = vmax.f32 %v1323, 0.0
    %1326 = vrot.lane.b32.xlu0 %v1324, 32
    %v1327 = vpop.permute.xlu0 %1326
    %1329 = vst.msk [vmem:[#allocation3 + $0x8] sm:$0x3] %vm488, %v1327
    %v1330 = vld [vmem:[#allocation2 + $0xa] sm:$0x3]
    %v1331 = vsel %vm269, %v1220, 0
    %1333 = vmatprep.subr.mxu0 0.0
    %1334 = vmatpush1.msra.mxu0 %v243
    %1335 = vmatprep.subr.mxu0 0.0
    %1336 = vmatpush1.msra.mxu0 %v244
    %1337 = vmatprep.subr.mxu0 0.0
    %1338 = vmatpush1.msra.mxu0 %v245
    %1339 = vmatprep.subr.mxu0 0.0
    %1340 = vmatpush1.msra.mxu0 %v246
    %1341 = vmatprep.subr.mxu0 0.0
    %1342 = vmatpush1.msra.mxu0 0.0
    %1343 = vmatprep.subr.mxu0 0.0
    %1344 = vmatpush1.msra.mxu0 0.0
    %1345 = vmatprep.subr.mxu0 0.0
    %1346 = vmatpush1.msra.mxu0 0.0
    %1347 = vmatprep.subr.mxu0 0.0
    %1348 = vmatpush1.msra.mxu0 0.0
    %1349 = vmatprep.subr.mxu0 0.0
    %1350 = vmatpush1.msra.mxu0 0.0
    %1351 = vmatprep.subr.mxu0 0.0
    %1352 = vmatpush1.msra.mxu0 0.0
    %1353 = vmatprep.subr.mxu0 0.0
    %1354 = vmatpush1.msra.mxu0 0.0
    %1355 = vmatprep.subr.mxu0 0.0
    %1356 = vmatpush1.msra.mxu0 0.0
    %1357 = vmatprep.subr.mxu0 0.0
    %1358 = vmatpush1.msra.mxu0 0.0
    %1359 = vmatprep.subr.mxu0 0.0
    %1360 = vmatpush1.msra.mxu0 0.0
    %1361 = vmatprep.subr.mxu0 0.0
    %1362 = vmatpush1.msra.mxu0 0.0
    %1363 = vmatprep.subr.mxu0 0.0
    %1364 = vmatpush1.msra.mxu0 0.0
    %1365 = vmatprep.subr.mxu0 0.0
    %1366 = vmatpush1.msra.mxu0 0.0
    %1367 = vmatprep.subr.mxu0 0.0
    %1368 = vmatpush1.msra.mxu0 0.0
    %1369 = vmatprep.subr.mxu0 0.0
    %1370 = vmatpush1.msra.mxu0 0.0
    %1371 = vmatprep.subr.mxu0 0.0
    %1372 = vmatpush1.msra.mxu0 0.0
    %1373 = vmatprep.subr.mxu0 0.0
    %1374 = vmatpush1.msra.mxu0 0.0
    %1375 = vmatprep.subr.mxu0 0.0
    %1376 = vmatpush1.msra.mxu0 0.0
    %1377 = vmatprep.subr.mxu0 0.0
    %1378 = vmatpush1.msra.mxu0 0.0
    %1379 = vmatprep.subr.mxu0 0.0
    %1380 = vmatpush1.msra.mxu0 0.0
    %1381 = vmatprep.subr.mxu0 0.0
    %1382 = vmatpush1.msra.mxu0 0.0
    %1383 = vmatprep.subr.mxu0 0.0
    %1384 = vmatpush1.msra.mxu0 0.0
    %1385 = vmatprep.subr.mxu0 0.0
    %1386 = vmatpush1.msra.mxu0 0.0
    %1387 = vmatprep.subr.mxu0 0.0
    %1388 = vmatpush1.msra.mxu0 0.0
    %1389 = vmatprep.subr.mxu0 0.0
    %1390 = vmatpush1.msra.mxu0 0.0
    %1391 = vmatprep.subr.mxu0 0.0
    %1392 = vmatpush1.msra.mxu0 0.0
    %1393 = vmatprep.subr.mxu0 0.0
    %1394 = vmatpush1.msra.mxu0 0.0
    %1395 = vmatprep.subr.mxu0 0.0
    %1396 = vmatpush1.msra.mxu0 0.0
    %1397 = vmatprep.mubr.f32.mxu0 0.0
    %1398 = vmatmul.mubr.f32.gmra.mrb[0].mxu0 %v1331
    %v1399 = vpop.f32.mrb[0].mxu0
    %v1400 = vadd.f32 0.0, %v1399
    %v1401 = vpop.f32.mrb[0].mxu0
    %1402 = vdwg.mxu0
    %v1403 = vadd.f32 %v1330, %v1400
    %v1404 = vxor.u32 %v1403, 2147483648
    %v1405 = vmul.f32 %v1404, 1.442695
    %v1406 = vpow.pop %v1405
    %v1407 = vadd.f32 %v1406, 1.0
    %v1408 = vrcp.pop %v1407
    %v1409 = vmul.f32 1.0, %v1408
    %v1410 = vtanh.pop %v1403
    %v1411 = vmul.f32 %v1409, %v1211
    %1413 = vrot.lane.b32.xlu0 %v1410, 64
    %v1414 = vpop.permute.xlu0 %1413
    %v1416 = vmul.f32 %v1409, %v1414
    %1418 = vrot.lane.b32.xlu0 %v1416, 32
    %v1419 = vpop.permute.xlu0 %1418
    %v1421 = vadd.f32 %v1411, %v1419
    %v1422 = vtanh.pop %v1421
    %1424 = vrot.lane.b32.xlu0 %v1422, 64
    %v1425 = vpop.permute.xlu0 %1424
    %v1427 = vmul.f32 %v1409, %v1425
    %1429 = vrot.lane.b32.xlu0 %v1427, 32
    %v1430 = vpop.permute.xlu0 %1429
    %1433 = vrot.lane.b32.xlu0 %v1323, 64
    %v1434 = vpop.permute.xlu0 %1433
    %v1436 = vsel %vm269, %v1430, %v1434
    %v1438 = vsel %vm381, %v1436, 0
    %1440 = vmatprep.subr.mxu0 0.0
    %1441 = vmatpush1.msra.mxu0 %v247
    %1442 = vmatprep.subr.mxu0 0.0
    %1443 = vmatpush1.msra.mxu0 %v248
    %1444 = vmatprep.subr.mxu0 0.0
    %1445 = vmatpush1.msra.mxu0 %v249
    %1446 = vmatprep.subr.mxu0 0.0
    %1447 = vmatpush1.msra.mxu0 %v250
    %1448 = vmatprep.subr.mxu0 0.0
    %1449 = vmatpush1.msra.mxu0 %v251
    %1450 = vmatprep.subr.mxu0 0.0
    %1451 = vmatpush1.msra.mxu0 %v252
    %1452 = vmatprep.subr.mxu0 0.0
    %1453 = vmatpush1.msra.mxu0 %v253
    %1454 = vmatprep.subr.mxu0 0.0
    %1455 = vmatpush1.msra.mxu0 %v254
    %1456 = vmatprep.subr.mxu0 0.0
    %1457 = vmatpush1.msra.mxu0 0.0
    %1458 = vmatprep.subr.mxu0 0.0
    %1459 = vmatpush1.msra.mxu0 0.0
    %1460 = vmatprep.subr.mxu0 0.0
    %1461 = vmatpush1.msra.mxu0 0.0
    %1462 = vmatprep.subr.mxu0 0.0
    %1463 = vmatpush1.msra.mxu0 0.0
    %1464 = vmatprep.subr.mxu0 0.0
    %1465 = vmatpush1.msra.mxu0 0.0
    %1466 = vmatprep.subr.mxu0 0.0
    %1467 = vmatpush1.msra.mxu0 0.0
    %1468 = vmatprep.subr.mxu0 0.0
    %1469 = vmatpush1.msra.mxu0 0.0
    %1470 = vmatprep.subr.mxu0 0.0
    %1471 = vmatpush1.msra.mxu0 0.0
    %1472 = vmatprep.subr.mxu0 0.0
    %1473 = vmatpush1.msra.mxu0 0.0
    %1474 = vmatprep.subr.mxu0 0.0
    %1475 = vmatpush1.msra.mxu0 0.0
    %1476 = vmatprep.subr.mxu0 0.0
    %1477 = vmatpush1.msra.mxu0 0.0
    %1478 = vmatprep.subr.mxu0 0.0
    %1479 = vmatpush1.msra.mxu0 0.0
    %1480 = vmatprep.subr.mxu0 0.0
    %1481 = vmatpush1.msra.mxu0 0.0
    %1482 = vmatprep.subr.mxu0 0.0
    %1483 = vmatpush1.msra.mxu0 0.0
    %1484 = vmatprep.subr.mxu0 0.0
    %1485 = vmatpush1.msra.mxu0 0.0
    %1486 = vmatprep.subr.mxu0 0.0
    %1487 = vmatpush1.msra.mxu0 0.0
    %1488 = vmatprep.subr.mxu0 0.0
    %1489 = vmatpush1.msra.mxu0 0.0
    %1490 = vmatprep.subr.mxu0 0.0
    %1491 = vmatpush1.msra.mxu0 0.0
    %1492 = vmatprep.subr.mxu0 0.0
    %1493 = vmatpush1.msra.mxu0 0.0
    %1494 = vmatprep.subr.mxu0 0.0
    %1495 = vmatpush1.msra.mxu0 0.0
    %1496 = vmatprep.subr.mxu0 0.0
    %1497 = vmatpush1.msra.mxu0 0.0
    %1498 = vmatprep.subr.mxu0 0.0
    %1499 = vmatpush1.msra.mxu0 0.0
    %1500 = vmatprep.subr.mxu0 0.0
    %1501 = vmatpush1.msra.mxu0 0.0
    %1502 = vmatprep.subr.mxu0 0.0
    %1503 = vmatpush1.msra.mxu0 0.0
    %1504 = vmatprep.mubr.f32.mxu0 0.0
    %1505 = vmatmul.mubr.f32.gmra.mrb[0].mxu0 %v1438
    %v1506 = vpop.f32.mrb[0].mxu0
    %v1507 = vadd.f32 %v260, %v1506
    %v1508 = vpop.f32.mrb[0].mxu0
    %1509 = vdwg.mxu0
    %v1510 = vxor.u32 %v1507, 2147483648
    %v1511 = vmul.f32 %v1510, 1.442695
    %v1512 = vpow.pop %v1511
    %v1513 = vadd.f32 %v1512, 1.0
    %v1514 = vrcp.pop %v1513
    %v1515 = vmul.f32 1.0, %v1514
    %v1516 = vtanh.pop %v1507
    %v1517 = vmul.f32 %v1515, %v1317
    %1519 = vrot.lane.b32.xlu0 %v1516, 64
    %v1520 = vpop.permute.xlu0 %1519
    %v1522 = vmul.f32 %v1515, %v1520
    %1524 = vrot.lane.b32.xlu0 %v1522, 32
    %v1525 = vpop.permute.xlu0 %1524
    %v1527 = vadd.f32 %v1517, %v1525
    %v1528 = vtanh.pop %v1527
    %1530 = vrot.lane.b32.xlu0 %v1528, 64
    %v1531 = vpop.permute.xlu0 %1530
    %v1533 = vmul.f32 %v1515, %v1531
    %v1534 = vmax.f32 %v1533, 0.0
    %1536 = vrot.lane.b32.xlu0 %v1534, 32
    %v1537 = vpop.permute.xlu0 %1536
    %1539 = vst.msk [vmem:[#allocation3 + $0xa] sm:$0x3] %vm488, %v1537
    %v1540 = vld [vmem:[#allocation2 + $0xc] sm:$0x3]
    %v1541 = vsel %vm269, %v1430, 0
    %1543 = vmatprep.subr.mxu0 0.0
    %1544 = vmatpush1.msra.mxu0 %v243
    %1545 = vmatprep.subr.mxu0 0.0
    %1546 = vmatpush1.msra.mxu0 %v244
    %1547 = vmatprep.subr.mxu0 0.0
    %1548 = vmatpush1.msra.mxu0 %v245
    %1549 = vmatprep.subr.mxu0 0.0
    %1550 = vmatpush1.msra.mxu0 %v246
    %1551 = vmatprep.subr.mxu0 0.0
    %1552 = vmatpush1.msra.mxu0 0.0
    %1553 = vmatprep.subr.mxu0 0.0
    %1554 = vmatpush1.msra.mxu0 0.0
    %1555 = vmatprep.subr.mxu0 0.0
    %1556 = vmatpush1.msra.mxu0 0.0
    %1557 = vmatprep.subr.mxu0 0.0
    %1558 = vmatpush1.msra.mxu0 0.0
    %1559 = vmatprep.subr.mxu0 0.0
    %1560 = vmatpush1.msra.mxu0 0.0
    %1561 = vmatprep.subr.mxu0 0.0
    %1562 = vmatpush1.msra.mxu0 0.0
    %1563 = vmatprep.subr.mxu0 0.0
    %1564 = vmatpush1.msra.mxu0 0.0
    %1565 = vmatprep.subr.mxu0 0.0
    %1566 = vmatpush1.msra.mxu0 0.0
    %1567 = vmatprep.subr.mxu0 0.0
    %1568 = vmatpush1.msra.mxu0 0.0
    %1569 = vmatprep.subr.mxu0 0.0
    %1570 = vmatpush1.msra.mxu0 0.0
    %1571 = vmatprep.subr.mxu0 0.0
    %1572 = vmatpush1.msra.mxu0 0.0
    %1573 = vmatprep.subr.mxu0 0.0
    %1574 = vmatpush1.msra.mxu0 0.0
    %1575 = vmatprep.subr.mxu0 0.0
    %1576 = vmatpush1.msra.mxu0 0.0
    %1577 = vmatprep.subr.mxu0 0.0
    %1578 = vmatpush1.msra.mxu0 0.0
    %1579 = vmatprep.subr.mxu0 0.0
    %1580 = vmatpush1.msra.mxu0 0.0
    %1581 = vmatprep.subr.mxu0 0.0
    %1582 = vmatpush1.msra.mxu0 0.0
    %1583 = vmatprep.subr.mxu0 0.0
    %1584 = vmatpush1.msra.mxu0 0.0
    %1585 = vmatprep.subr.mxu0 0.0
    %1586 = vmatpush1.msra.mxu0 0.0
    %1587 = vmatprep.subr.mxu0 0.0
    %1588 = vmatpush1.msra.mxu0 0.0
    %1589 = vmatprep.subr.mxu0 0.0
    %1590 = vmatpush1.msra.mxu0 0.0
    %1591 = vmatprep.subr.mxu0 0.0
    %1592 = vmatpush1.msra.mxu0 0.0
    %1593 = vmatprep.subr.mxu0 0.0
    %1594 = vmatpush1.msra.mxu0 0.0
    %1595 = vmatprep.subr.mxu0 0.0
    %1596 = vmatpush1.msra.mxu0 0.0
    %1597 = vmatprep.subr.mxu0 0.0
    %1598 = vmatpush1.msra.mxu0 0.0
    %1599 = vmatprep.subr.mxu0 0.0
    %1600 = vmatpush1.msra.mxu0 0.0
    %1601 = vmatprep.subr.mxu0 0.0
    %1602 = vmatpush1.msra.mxu0 0.0
    %1603 = vmatprep.subr.mxu0 0.0
    %1604 = vmatpush1.msra.mxu0 0.0
    %1605 = vmatprep.subr.mxu0 0.0
    %1606 = vmatpush1.msra.mxu0 0.0
    %1607 = vmatprep.mubr.f32.mxu0 0.0
    %1608 = vmatmul.mubr.f32.gmra.mrb[0].mxu0 %v1541
    %v1609 = vpop.f32.mrb[0].mxu0
    %v1610 = vadd.f32 0.0, %v1609
    %v1611 = vpop.f32.mrb[0].mxu0
    %1612 = vdwg.mxu0
    %v1613 = vadd.f32 %v1540, %v1610
    %v1614 = vxor.u32 %v1613, 2147483648
    %v1615 = vmul.f32 %v1614, 1.442695
    %v1616 = vpow.pop %v1615
    %v1617 = vadd.f32 %v1616, 1.0
    %v1618 = vrcp.pop %v1617
    %v1619 = vmul.f32 1.0, %v1618
    %v1620 = vtanh.pop %v1613
    %v1621 = vmul.f32 %v1619, %v1421
    %1623 = vrot.lane.b32.xlu0 %v1620, 64
    %v1624 = vpop.permute.xlu0 %1623
    %v1626 = vmul.f32 %v1619, %v1624
    %1628 = vrot.lane.b32.xlu0 %v1626, 32
    %v1629 = vpop.permute.xlu0 %1628
    %v1631 = vadd.f32 %v1621, %v1629
    %v1632 = vtanh.pop %v1631
    %1634 = vrot.lane.b32.xlu0 %v1632, 64
    %v1635 = vpop.permute.xlu0 %1634
    %v1637 = vmul.f32 %v1619, %v1635
    %1639 = vrot.lane.b32.xlu0 %v1637, 32
    %v1640 = vpop.permute.xlu0 %1639
    %1643 = vrot.lane.b32.xlu0 %v1533, 64
    %v1644 = vpop.permute.xlu0 %1643
    %v1646 = vsel %vm269, %v1640, %v1644
    %v1648 = vsel %vm381, %v1646, 0
    %1650 = vmatprep.subr.mxu0 0.0
    %1651 = vmatpush1.msra.mxu0 %v247
    %1652 = vmatprep.subr.mxu0 0.0
    %1653 = vmatpush1.msra.mxu0 %v248
    %1654 = vmatprep.subr.mxu0 0.0
    %1655 = vmatpush1.msra.mxu0 %v249
    %1656 = vmatprep.subr.mxu0 0.0
    %1657 = vmatpush1.msra.mxu0 %v250
    %1658 = vmatprep.subr.mxu0 0.0
    %1659 = vmatpush1.msra.mxu0 %v251
    %1660 = vmatprep.subr.mxu0 0.0
    %1661 = vmatpush1.msra.mxu0 %v252
    %1662 = vmatprep.subr.mxu0 0.0
    %1663 = vmatpush1.msra.mxu0 %v253
    %1664 = vmatprep.subr.mxu0 0.0
    %1665 = vmatpush1.msra.mxu0 %v254
    %1666 = vmatprep.subr.mxu0 0.0
    %1667 = vmatpush1.msra.mxu0 0.0
    %1668 = vmatprep.subr.mxu0 0.0
    %1669 = vmatpush1.msra.mxu0 0.0
    %1670 = vmatprep.subr.mxu0 0.0
    %1671 = vmatpush1.msra.mxu0 0.0
    %1672 = vmatprep.subr.mxu0 0.0
    %1673 = vmatpush1.msra.mxu0 0.0
    %1674 = vmatprep.subr.mxu0 0.0
    %1675 = vmatpush1.msra.mxu0 0.0
    %1676 = vmatprep.subr.mxu0 0.0
    %1677 = vmatpush1.msra.mxu0 0.0
    %1678 = vmatprep.subr.mxu0 0.0
    %1679 = vmatpush1.msra.mxu0 0.0
    %1680 = vmatprep.subr.mxu0 0.0
    %1681 = vmatpush1.msra.mxu0 0.0
    %1682 = vmatprep.subr.mxu0 0.0
    %1683 = vmatpush1.msra.mxu0 0.0
    %1684 = vmatprep.subr.mxu0 0.0
    %1685 = vmatpush1.msra.mxu0 0.0
    %1686 = vmatprep.subr.mxu0 0.0
    %1687 = vmatpush1.msra.mxu0 0.0
    %1688 = vmatprep.subr.mxu0 0.0
    %1689 = vmatpush1.msra.mxu0 0.0
    %1690 = vmatprep.subr.mxu0 0.0
    %1691 = vmatpush1.msra.mxu0 0.0
    %1692 = vmatprep.subr.mxu0 0.0
    %1693 = vmatpush1.msra.mxu0 0.0
    %1694 = vmatprep.subr.mxu0 0.0
    %1695 = vmatpush1.msra.mxu0 0.0
    %1696 = vmatprep.subr.mxu0 0.0
    %1697 = vmatpush1.msra.mxu0 0.0
    %1698 = vmatprep.subr.mxu0 0.0
    %1699 = vmatpush1.msra.mxu0 0.0
    %1700 = vmatprep.subr.mxu0 0.0
    %1701 = vmatpush1.msra.mxu0 0.0
    %1702 = vmatprep.subr.mxu0 0.0
    %1703 = vmatpush1.msra.mxu0 0.0
    %1704 = vmatprep.subr.mxu0 0.0
    %1705 = vmatpush1.msra.mxu0 0.0
    %1706 = vmatprep.subr.mxu0 0.0
    %1707 = vmatpush1.msra.mxu0 0.0
    %1708 = vmatprep.subr.mxu0 0.0
    %1709 = vmatpush1.msra.mxu0 0.0
    %1710 = vmatprep.subr.mxu0 0.0
    %1711 = vmatpush1.msra.mxu0 0.0
    %1712 = vmatprep.subr.mxu0 0.0
    %1713 = vmatpush1.msra.mxu0 0.0
    %1714 = vmatprep.mubr.f32.mxu0 0.0
    %1715 = vmatmul.mubr.f32.gmra.mrb[0].mxu0 %v1648
    %v1716 = vpop.f32.mrb[0].mxu0
    %v1717 = vadd.f32 %v260, %v1716
    %v1718 = vpop.f32.mrb[0].mxu0
    %1719 = vdwg.mxu0
    %v1720 = vxor.u32 %v1717, 2147483648
    %v1721 = vmul.f32 %v1720, 1.442695
    %v1722 = vpow.pop %v1721
    %v1723 = vadd.f32 %v1722, 1.0
    %v1724 = vrcp.pop %v1723
    %v1725 = vmul.f32 1.0, %v1724
    %v1726 = vtanh.pop %v1717
    %v1727 = vmul.f32 %v1725, %v1527
    %1729 = vrot.lane.b32.xlu0 %v1726, 64
    %v1730 = vpop.permute.xlu0 %1729
    %v1732 = vmul.f32 %v1725, %v1730
    %1734 = vrot.lane.b32.xlu0 %v1732, 32
    %v1735 = vpop.permute.xlu0 %1734
    %v1737 = vadd.f32 %v1727, %v1735
    %v1738 = vtanh.pop %v1737
    %1740 = vrot.lane.b32.xlu0 %v1738, 64
    %v1741 = vpop.permute.xlu0 %1740
    %v1743 = vmul.f32 %v1725, %v1741
    %v1744 = vmax.f32 %v1743, 0.0
    %1746 = vrot.lane.b32.xlu0 %v1744, 32
    %v1747 = vpop.permute.xlu0 %1746
    %1749 = vst.msk [vmem:[#allocation3 + $0xc] sm:$0x3] %vm488, %v1747
    %v1750 = vld [vmem:[#allocation2 + $0xe] sm:$0x3]
    %v1751 = vsel %vm269, %v1640, 0
    %1753 = vmatprep.subr.mxu0 0.0
    %1754 = vmatpush1.msra.mxu0 %v243
    %1755 = vmatprep.subr.mxu0 0.0
    %1756 = vmatpush1.msra.mxu0 %v244
    %1757 = vmatprep.subr.mxu0 0.0
    %1758 = vmatpush1.msra.mxu0 %v245
    %1759 = vmatprep.subr.mxu0 0.0
    %1760 = vmatpush1.msra.mxu0 %v246
    %1761 = vmatprep.subr.mxu0 0.0
    %1762 = vmatpush1.msra.mxu0 0.0
    %1763 = vmatprep.subr.mxu0 0.0
    %1764 = vmatpush1.msra.mxu0 0.0
    %1765 = vmatprep.subr.mxu0 0.0
    %1766 = vmatpush1.msra.mxu0 0.0
    %1767 = vmatprep.subr.mxu0 0.0
    %1768 = vmatpush1.msra.mxu0 0.0
    %1769 = vmatprep.subr.mxu0 0.0
    %1770 = vmatpush1.msra.mxu0 0.0
    %1771 = vmatprep.subr.mxu0 0.0
    %1772 = vmatpush1.msra.mxu0 0.0
    %1773 = vmatprep.subr.mxu0 0.0
    %1774 = vmatpush1.msra.mxu0 0.0
    %1775 = vmatprep.subr.mxu0 0.0
    %1776 = vmatpush1.msra.mxu0 0.0
    %1777 = vmatprep.subr.mxu0 0.0
    %1778 = vmatpush1.msra.mxu0 0.0
    %1779 = vmatprep.subr.mxu0 0.0
    %1780 = vmatpush1.msra.mxu0 0.0
    %1781 = vmatprep.subr.mxu0 0.0
    %1782 = vmatpush1.msra.mxu0 0.0
    %1783 = vmatprep.subr.mxu0 0.0
    %1784 = vmatpush1.msra.mxu0 0.0
    %1785 = vmatprep.subr.mxu0 0.0
    %1786 = vmatpush1.msra.mxu0 0.0
    %1787 = vmatprep.subr.mxu0 0.0
    %1788 = vmatpush1.msra.mxu0 0.0
    %1789 = vmatprep.subr.mxu0 0.0
    %1790 = vmatpush1.msra.mxu0 0.0
    %1791 = vmatprep.subr.mxu0 0.0
    %1792 = vmatpush1.msra.mxu0 0.0
    %1793 = vmatprep.subr.mxu0 0.0
    %1794 = vmatpush1.msra.mxu0 0.0
    %1795 = vmatprep.subr.mxu0 0.0
    %1796 = vmatpush1.msra.mxu0 0.0
    %1797 = vmatprep.subr.mxu0 0.0
    %1798 = vmatpush1.msra.mxu0 0.0
    %1799 = vmatprep.subr.mxu0 0.0
    %1800 = vmatpush1.msra.mxu0 0.0
    %1801 = vmatprep.subr.mxu0 0.0
    %1802 = vmatpush1.msra.mxu0 0.0
    %1803 = vmatprep.subr.mxu0 0.0
    %1804 = vmatpush1.msra.mxu0 0.0
    %1805 = vmatprep.subr.mxu0 0.0
    %1806 = vmatpush1.msra.mxu0 0.0
    %1807 = vmatprep.subr.mxu0 0.0
    %1808 = vmatpush1.msra.mxu0 0.0
    %1809 = vmatprep.subr.mxu0 0.0
    %1810 = vmatpush1.msra.mxu0 0.0
    %1811 = vmatprep.subr.mxu0 0.0
    %1812 = vmatpush1.msra.mxu0 0.0
    %1813 = vmatprep.subr.mxu0 0.0
    %1814 = vmatpush1.msra.mxu0 0.0
    %1815 = vmatprep.subr.mxu0 0.0
    %1816 = vmatpush1.msra.mxu0 0.0
    %1817 = vmatprep.mubr.f32.mxu0 0.0
    %1818 = vmatmul.mubr.f32.gmra.mrb[0].mxu0 %v1751
    %v1819 = vpop.f32.mrb[0].mxu0
    %v1820 = vadd.f32 0.0, %v1819
    %v1821 = vpop.f32.mrb[0].mxu0
    %1822 = vdwg.mxu0
    %v1823 = vadd.f32 %v1750, %v1820
    %v1824 = vxor.u32 %v1823, 2147483648
    %v1825 = vmul.f32 %v1824, 1.442695
    %v1826 = vpow.pop %v1825
    %v1827 = vadd.f32 %v1826, 1.0
    %v1828 = vrcp.pop %v1827
    %v1829 = vmul.f32 1.0, %v1828
    %v1830 = vtanh.pop %v1823
    %v1831 = vmul.f32 %v1829, %v1631
    %1833 = vrot.lane.b32.xlu0 %v1830, 64
    %v1834 = vpop.permute.xlu0 %1833
    %v1836 = vmul.f32 %v1829, %v1834
    %1838 = vrot.lane.b32.xlu0 %v1836, 32
    %v1839 = vpop.permute.xlu0 %1838
    %v1841 = vadd.f32 %v1831, %v1839
    %v1842 = vtanh.pop %v1841
    %1844 = vrot.lane.b32.xlu0 %v1842, 64
    %v1845 = vpop.permute.xlu0 %1844
    %v1847 = vmul.f32 %v1829, %v1845
    %1849 = vrot.lane.b32.xlu0 %v1847, 32
    %v1850 = vpop.permute.xlu0 %1849
    %1853 = vrot.lane.b32.xlu0 %v1743, 64
    %v1854 = vpop.permute.xlu0 %1853
    %v1856 = vsel %vm269, %v1850, %v1854
    %v1858 = vsel %vm381, %v1856, 0
    %1860 = vmatprep.subr.mxu0 0.0
    %1861 = vmatpush1.msra.mxu0 %v247
    %1862 = vmatprep.subr.mxu0 0.0
    %1863 = vmatpush1.msra.mxu0 %v248
    %1864 = vmatprep.subr.mxu0 0.0
    %1865 = vmatpush1.msra.mxu0 %v249
    %1866 = vmatprep.subr.mxu0 0.0
    %1867 = vmatpush1.msra.mxu0 %v250
    %1868 = vmatprep.subr.mxu0 0.0
    %1869 = vmatpush1.msra.mxu0 %v251
    %1870 = vmatprep.subr.mxu0 0.0
    %1871 = vmatpush1.msra.mxu0 %v252
    %1872 = vmatprep.subr.mxu0 0.0
    %1873 = vmatpush1.msra.mxu0 %v253
    %1874 = vmatprep.subr.mxu0 0.0
    %1875 = vmatpush1.msra.mxu0 %v254
    %1876 = vmatprep.subr.mxu0 0.0
    %1877 = vmatpush1.msra.mxu0 0.0
    %1878 = vmatprep.subr.mxu0 0.0
    %1879 = vmatpush1.msra.mxu0 0.0
    %1880 = vmatprep.subr.mxu0 0.0
    %1881 = vmatpush1.msra.mxu0 0.0
    %1882 = vmatprep.subr.mxu0 0.0
    %1883 = vmatpush1.msra.mxu0 0.0
    %1884 = vmatprep.subr.mxu0 0.0
    %1885 = vmatpush1.msra.mxu0 0.0
    %1886 = vmatprep.subr.mxu0 0.0
    %1887 = vmatpush1.msra.mxu0 0.0
    %1888 = vmatprep.subr.mxu0 0.0
    %1889 = vmatpush1.msra.mxu0 0.0
    %1890 = vmatprep.subr.mxu0 0.0
    %1891 = vmatpush1.msra.mxu0 0.0
    %1892 = vmatprep.subr.mxu0 0.0
    %1893 = vmatpush1.msra.mxu0 0.0
    %1894 = vmatprep.subr.mxu0 0.0
    %1895 = vmatpush1.msra.mxu0 0.0
    %1896 = vmatprep.subr.mxu0 0.0
    %1897 = vmatpush1.msra.mxu0 0.0
    %1898 = vmatprep.subr.mxu0 0.0
    %1899 = vmatpush1.msra.mxu0 0.0
    %1900 = vmatprep.subr.mxu0 0.0
    %1901 = vmatpush1.msra.mxu0 0.0
    %1902 = vmatprep.subr.mxu0 0.0
    %1903 = vmatpush1.msra.mxu0 0.0
    %1904 = vmatprep.subr.mxu0 0.0
    %1905 = vmatpush1.msra.mxu0 0.0
    %1906 = vmatprep.subr.mxu0 0.0
    %1907 = vmatpush1.msra.mxu0 0.0
    %1908 = vmatprep.subr.mxu0 0.0
    %1909 = vmatpush1.msra.mxu0 0.0
    %1910 = vmatprep.subr.mxu0 0.0
    %1911 = vmatpush1.msra.mxu0 0.0
    %1912 = vmatprep.subr.mxu0 0.0
    %1913 = vmatpush1.msra.mxu0 0.0
    %1914 = vmatprep.subr.mxu0 0.0
    %1915 = vmatpush1.msra.mxu0 0.0
    %1916 = vmatprep.subr.mxu0 0.0
    %1917 = vmatpush1.msra.mxu0 0.0
    %1918 = vmatprep.subr.mxu0 0.0
    %1919 = vmatpush1.msra.mxu0 0.0
    %1920 = vmatprep.subr.mxu0 0.0
    %1921 = vmatpush1.msra.mxu0 0.0
    %1922 = vmatprep.subr.mxu0 0.0
    %1923 = vmatpush1.msra.mxu0 0.0
    %1924 = vmatprep.mubr.f32.mxu0 0.0
    %1925 = vmatmul.mubr.f32.gmra.mrb[0].mxu0 %v1858
    %v1926 = vpop.f32.mrb[0].mxu0
    %v1927 = vadd.f32 %v260, %v1926
    %v1928 = vpop.f32.mrb[0].mxu0
    %1929 = vdwg.mxu0
    %v1930 = vxor.u32 %v1927, 2147483648
    %v1931 = vmul.f32 %v1930, 1.442695
    %v1932 = vpow.pop %v1931
    %v1933 = vadd.f32 %v1932, 1.0
    %v1934 = vrcp.pop %v1933
    %v1935 = vmul.f32 1.0, %v1934
    %v1936 = vtanh.pop %v1927
    %v1937 = vmul.f32 %v1935, %v1737
    %1939 = vrot.lane.b32.xlu0 %v1936, 64
    %v1940 = vpop.permute.xlu0 %1939
    %v1942 = vmul.f32 %v1935, %v1940
    %1944 = vrot.lane.b32.xlu0 %v1942, 32
    %v1945 = vpop.permute.xlu0 %1944
    %v1947 = vadd.f32 %v1937, %v1945
    %v1948 = vtanh.pop %v1947
    %1950 = vrot.lane.b32.xlu0 %v1948, 64
    %v1951 = vpop.permute.xlu0 %1950
    %v1953 = vmul.f32 %v1935, %v1951
    %v1954 = vmax.f32 %v1953, 0.0
    %1956 = vrot.lane.b32.xlu0 %v1954, 32
    %v1957 = vpop.permute.xlu0 %1956
    %1959 = vst.msk [vmem:[#allocation3 + $0xe] sm:$0x3] %vm488, %v1957
    %1960 = vst.msk [vmem:[#allocation4] sm:$0x3] %vm488, %v1850
    %1962 = vrot.lane.b32.xlu0 %v1953, 32
    %v1963 = vpop.permute.xlu0 %1962
    %s1965 = scalar_lea.vmem [#allocation4], 2
    %1966 = vst.msk [vmem:[%s1965] sm:$0x3] %vm488, %v1963
    %1968 = vrot.lane.b32.xlu0 %v1841, 96
    %v1969 = vpop.permute.xlu0 %1968
    %1971 = vst.msk [vmem:[#allocation6] sm:$0x3] %vm488, %v1969
    %1973 = vrot.lane.b32.xlu0 %v1947, 96
    %v1974 = vpop.permute.xlu0 %1973
    %s1976 = scalar_lea.vmem [#allocation6], 2
    %1977 = vst.msk [vmem:[%s1976] sm:$0x3] %vm488, %v1974
    %v1978 = vld [vmem:[#allocation3] sm:$0xff]
    %v1979 = vld [vmem:[#allocation3 + $0x8] sm:$0xff]
    %v1980 = vld [vmem:[%s9] sm:$0xff]
    %v1981 = vld [vmem:[%s9 + $0x8] sm:$0xff]
    %v1982 = vld [vmem:[%s9 + $0x10] sm:$0xff]
    %v1983 = vld [vmem:[%s9 + $0x18] sm:$0xff]
    %v1984 = vld [vmem:[%s10] sm:$0x1]
    %v1986 = vlaneseq
    %v1987 = vshrl.u32 %v1986, 7
    %v1988 = vsub.s32 0, %v1987
    %v1989 = vrot.slane %v1984, %v1988
    %v1992 = vsel %vm269, %v1978, 0
    %v1995 = vsel %vm269, %v1979, 0
    %1997 = vmatprep.subr.mxu0 0.0
    %1998 = vmatpush1.msra.mxu0 %v1980
    %1999 = vmatprep.subr.mxu0 0.0
    %2000 = vmatpush1.msra.mxu0 %v1981
    %2001 = vmatprep.subr.mxu0 0.0
    %2002 = vmatpush1.msra.mxu0 %v1982
    %2003 = vmatprep.subr.mxu0 0.0
    %2004 = vmatpush1.msra.mxu0 %v1983
    %2005 = vmatprep.subr.mxu0 0.0
    %2006 = vmatpush1.msra.mxu0 0.0
    %2007 = vmatprep.subr.mxu0 0.0
    %2008 = vmatpush1.msra.mxu0 0.0
    %2009 = vmatprep.subr.mxu0 0.0
    %2010 = vmatpush1.msra.mxu0 0.0
    %2011 = vmatprep.subr.mxu0 0.0
    %2012 = vmatpush1.msra.mxu0 0.0
    %2013 = vmatprep.subr.mxu0 0.0
    %2014 = vmatpush1.msra.mxu0 0.0
    %2015 = vmatprep.subr.mxu0 0.0
    %2016 = vmatpush1.msra.mxu0 0.0
    %2017 = vmatprep.subr.mxu0 0.0
    %2018 = vmatpush1.msra.mxu0 0.0
    %2019 = vmatprep.subr.mxu0 0.0
    %2020 = vmatpush1.msra.mxu0 0.0
    %2021 = vmatprep.subr.mxu0 0.0
    %2022 = vmatpush1.msra.mxu0 0.0
    %2023 = vmatprep.subr.mxu0 0.0
    %2024 = vmatpush1.msra.mxu0 0.0
    %2025 = vmatprep.subr.mxu0 0.0
    %2026 = vmatpush1.msra.mxu0 0.0
    %2027 = vmatprep.subr.mxu0 0.0
    %2028 = vmatpush1.msra.mxu0 0.0
    %2029 = vmatprep.subr.mxu0 0.0
    %2030 = vmatpush1.msra.mxu0 0.0
    %2031 = vmatprep.subr.mxu0 0.0
    %2032 = vmatpush1.msra.mxu0 0.0
    %2033 = vmatprep.subr.mxu0 0.0
    %2034 = vmatpush1.msra.mxu0 0.0
    %2035 = vmatprep.subr.mxu0 0.0
    %2036 = vmatpush1.msra.mxu0 0.0
    %2037 = vmatprep.subr.mxu0 0.0
    %2038 = vmatpush1.msra.mxu0 0.0
    %2039 = vmatprep.subr.mxu0 0.0
    %2040 = vmatpush1.msra.mxu0 0.0
    %2041 = vmatprep.subr.mxu0 0.0
    %2042 = vmatpush1.msra.mxu0 0.0
    %2043 = vmatprep.subr.mxu0 0.0
    %2044 = vmatpush1.msra.mxu0 0.0
    %2045 = vmatprep.subr.mxu0 0.0
    %2046 = vmatpush1.msra.mxu0 0.0
    %2047 = vmatprep.subr.mxu0 0.0
    %2048 = vmatpush1.msra.mxu0 0.0
    %2049 = vmatprep.subr.mxu0 0.0
    %2050 = vmatpush1.msra.mxu0 0.0
    %2051 = vmatprep.subr.mxu0 0.0
    %2052 = vmatpush1.msra.mxu0 0.0
    %2053 = vmatprep.subr.mxu0 0.0
    %2054 = vmatpush1.msra.mxu0 0.0
    %2055 = vmatprep.subr.mxu0 0.0
    %2056 = vmatpush1.msra.mxu0 0.0
    %2057 = vmatprep.subr.mxu0 0.0
    %2058 = vmatpush1.msra.mxu0 0.0
    %2059 = vmatprep.subr.mxu0 0.0
    %2060 = vmatpush1.msra.mxu0 0.0
    %2061 = vmatprep.mubr.f32.mxu0 0.0
    %2062 = vmatmul.mubr.f32.gmra.mrb[0].mxu0 %v1992
    %v2063 = vpop.f32.mrb[0].mxu0
    %v2064 = vadd.f32 %v1989, %v2063
    %v2065 = vpop.f32.mrb[0].mxu0
    %2066 = vmatprep.mubr.f32.mxu0 0.0
    %2067 = vmatmul.mubr.f32.gmra.mrb[0].mxu0 %v1995
    %v2068 = vpop.f32.mrb[0].mxu0
    %v2069 = vadd.f32 %v1989, %v2068
    %v2070 = vpop.f32.mrb[0].mxu0
    %2071 = vdwg.mxu0
    %2072 = vst [vmem:[%s11] sm:$0xff] %v2064
    %2073 = vst [vmem:[%s11 + $0x8] sm:$0xff] %v2069
    // Predicated region
    $region46: #{onehotnet_forward.1} parent=1 // pred_check
      _
    $region47: #{onehotnet_forward.1} parent=1 // pred_check_branch
      %2075 = sbr.rel (0) target = $region49
    $region48: #{onehotnet_forward.1} parent=1 // pred_region
      _
    $region49: #{onehotnet_forward.1} parent=1 // pred_fallthru
      _
    // Predicated region
    $region50: #{onehotnet_forward.1} parent=1 // pred_check
      _
    $region51: #{onehotnet_forward.1} parent=1 // pred_check_branch
      %2077 = sbr.rel (0) target = $region53
    $region52: #{onehotnet_forward.1} parent=1 // pred_region
      %s2079 = ssub.s32 64, 64
      %2080 = vsyncadd [#allocation5], %s2079
      %s2081 = sshll.u32 [#allocation4], 4
      %s2082 = int_to_ptr.vmem [resolvable:$true] %s2081
      %2087 = dma.vmem_to_hbm [thread:$0]  %s2082, 64, %s12, [#allocation5], 32, 32, 2
    $region53: #{onehotnet_forward.1} parent=1 // pred_fallthru
      _
    // Predicated region
    $region54: #{onehotnet_forward.1} parent=1 // pred_check
      _
    $region55: #{onehotnet_forward.1} parent=1 // pred_check_branch
      %2089 = sbr.rel (0) target = $region57
    $region56: #{onehotnet_forward.1} parent=1 // pred_region
      %s2091 = ssub.s32 64, 64
      %2092 = vsyncadd [#allocation7], %s2091
      %s2093 = sshll.u32 [#allocation6], 4
      %s2094 = int_to_ptr.vmem [resolvable:$true] %s2093
      %2099 = dma.vmem_to_hbm [thread:$0]  %s2094, 64, %s13, [#allocation7], 32, 32, 2
    $region57: #{onehotnet_forward.1} parent=1 // pred_fallthru
      _
    // Predicated region
    $region58: #{onehotnet_forward.1} parent=1 // pred_check
      _
    $region59: #{onehotnet_forward.1} parent=1 // pred_check_branch
      %2101 = sbr.rel (0) target = $region61
    $region60: #{onehotnet_forward.1} parent=1 // pred_region
      _
    $region61: #{onehotnet_forward.1} parent=1 // pred_fallthru
      _
    // Predicated region
    $region62: #{onehotnet_forward.1} parent=1 // pred_check
      _
    $region63: #{onehotnet_forward.1} parent=1 // pred_check_branch
      %2103 = sbr.rel (0) target = $region65
    $region64: #{onehotnet_forward.1} parent=1 // pred_region
      %2104 = dma.done [#allocation5], 64
    $region65: #{onehotnet_forward.1} parent=1 // pred_fallthru
      _
    // Predicated region
    $region66: #{onehotnet_forward.1} parent=1 // pred_check
      _
    $region67: #{onehotnet_forward.1} parent=1 // pred_check_branch
      %2106 = sbr.rel (0) target = $region69
    $region68: #{onehotnet_forward.1} parent=1 // pred_region
      %2107 = dma.done [#allocation7], 64
    $region69: #{onehotnet_forward.1} parent=1 // pred_fallthru
      _
    %2108 = vsyncpa [#allocation5], 1
    %2109 = vsyncpa [#allocation7], 1

</llo_original>
